<compile_context>
chip_gen: v5e
topology: v5e:2x2
jax: 0.10.0
libtpu: 0.0.40
codegen_flags: <defaults>
</compile_context>

<pallas_src>
import functools

import jax
import jax.numpy as jnp
import numpy as np
from jax.experimental import pallas as pl
from jax.experimental.pallas import tpu as pltpu


# ----------------------------------------------------------------------------
# Tiled matmul kernels: y = x @ w (+ bias), f32 accumulation in VMEM scratch.
# ----------------------------------------------------------------------------
def _matmul_kernel(x_ref, w_ref, o_ref, acc_ref):
    @pl.when(pl.program_id(2) == 0)
    def _():
        acc_ref[...] = jnp.zeros_like(acc_ref)

    acc_ref[...] += jnp.dot(x_ref[...], w_ref[...],
                            preferred_element_type=jnp.float32)

    @pl.when(pl.program_id(2) == pl.num_programs(2) - 1)
    def _():
        o_ref[...] = acc_ref[...].astype(o_ref.dtype)


def _matmul_bias_kernel(x_ref, w_ref, b_ref, o_ref, acc_ref):
    @pl.when(pl.program_id(2) == 0)
    def _():
        acc_ref[...] = jnp.zeros_like(acc_ref)

    acc_ref[...] += jnp.dot(x_ref[...], w_ref[...],
                            preferred_element_type=jnp.float32)

    @pl.when(pl.program_id(2) == pl.num_programs(2) - 1)
    def _():
        o_ref[...] = (acc_ref[...] + b_ref[...]).astype(o_ref.dtype)


def _pick_tile(dim, pref):
    # Use the preferred tile when it divides the dim, otherwise fall back to a
    # full-extent block (always legal w.r.t. the (8,128) constraint).
    return pref if (dim >= pref and dim % pref == 0) else dim


def matmul_pallas(x2d, w_kn, bias=None, *, tm=256, tn=256, tk=256):
    """x2d: (M, K) f32; w_kn: (K, N) f32; bias: optional (1, N) f32."""
    M, K = x2d.shape
    K2, N = w_kn.shape
    assert K == K2
    tm = _pick_tile(M, tm)
    tn = _pick_tile(N, tn)
    tk = _pick_tile(K, tk)
    grid = (M // tm, N // tn, K // tk)

    in_specs = [
        pl.BlockSpec((tm, tk), lambda i, j, k: (i, k)),
        pl.BlockSpec((tk, tn), lambda i, j, k: (k, j)),
    ]
    if bias is not None:
        in_specs.append(pl.BlockSpec((1, tn), lambda i, j, k: (0, j)))
        kernel = _matmul_bias_kernel
        args = (x2d, w_kn, bias)
    else:
        kernel = _matmul_kernel
        args = (x2d, w_kn)

    return pl.pallas_call(
        kernel,
        out_shape=jax.ShapeDtypeStruct((M, N), jnp.float32),
        grid=grid,
        in_specs=in_specs,
        out_specs=pl.BlockSpec((tm, tn), lambda i, j, k: (i, j)),
        scratch_shapes=[pltpu.VMEM((tm, tn), jnp.float32)],
        compiler_params=pltpu.CompilerParams(
            dimension_semantics=("parallel", "parallel", "arbitrary")),
    )(*args)


# ----------------------------------------------------------------------------
# Fast-weight recurrence, lane-vectorized over the B*H streams.
#
# Inputs are packed (T, d, BH): element [t, i, b*H+h] is component i of the
# head-(b,h) vector at time t.  Per stream (lane l):
#     W <- 0
#     o_t[j]  = sum_i q_t[i] * W[i, j]
#     k_t, v_t <- l2norm;  lr_t = sigmoid(pre_t)
#     W[i, j] += k_t[i] * lr_t[j] * (v_t[j] - sum_i' k_t[i'] * W[i', j])
# which is pure element-wise VPU work on (d, d, lane_block) vregs.
# ----------------------------------------------------------------------------
def _wm_recurrence_kernel(q_ref, k_ref, v_ref, lr_ref, o_ref,
                          w_ref, kn_ref, vn_ref, lrn_ref):
    @pl.when(pl.program_id(1) == 0)
    def _():
        w_ref[...] = jnp.zeros_like(w_ref)

    # Hoisted, vectorized pre-pass over the whole (Tc, d, LB) chunk:
    # F.normalize(..., dim=-1) (eps=1e-12 on the norm) and sigmoid(lr).
    kb = k_ref[...]
    vb = v_ref[...]
    kn_ref[...] = kb / jnp.maximum(
        jnp.sqrt(jnp.sum(kb * kb, axis=1, keepdims=True)), 1e-12)
    vn_ref[...] = vb / jnp.maximum(
        jnp.sqrt(jnp.sum(vb * vb, axis=1, keepdims=True)), 1e-12)
    lrn_ref[...] = jax.nn.sigmoid(lr_ref[...])

    n_t = q_ref.shape[0]

    def step(t, w):                      # w: (d, d, LB) carried in vregs
        q_t = q_ref[t]                   # (d, LB)
        k_t = kn_ref[t]
        v_t = vn_ref[t]
        lr_t = lrn_ref[t]
        # o_t[j, l] = sum_i q_t[i, l] * W[i, j, l]   (uses W before update)
        o_ref[t] = jnp.sum(q_t[:, None, :] * w, axis=0)
        pred = jnp.sum(k_t[:, None, :] * w, axis=0)          # k_t @ W
        upd = lr_t * (v_t - pred)                             # (d, LB)
        return w + k_t[:, None, :] * upd[None, :, :]

    w_final = jax.lax.fori_loop(0, n_t, step, w_ref[...])
    w_ref[...] = w_final                 # persist across T chunks


def wm_recurrence_pallas(q_p, k_p, v_p, lr_p, *, lane_pref=128, tc_pref=256):
    """Inputs (T, d, BH) f32, streams on the lane axis; returns o (T, d, BH)."""
    T, d, BH = q_p.shape
    lb = lane_pref if (BH >= lane_pref and BH % lane_pref == 0) else BH
    tc = tc_pref if (T >= tc_pref and T % tc_pref == 0) else T
    grid = (BH // lb, T // tc)

    io_spec = pl.BlockSpec((tc, d, lb), lambda l, t: (t, 0, l))

    return pl.pallas_call(
        _wm_recurrence_kernel,
        out_shape=jax.ShapeDtypeStruct((T, d, BH), jnp.float32),
        grid=grid,
        in_specs=[io_spec, io_spec, io_spec, io_spec],
        out_specs=io_spec,
        scratch_shapes=[
            pltpu.VMEM((d, d, lb), jnp.float32),    # fast-weight state W
            pltpu.VMEM((tc, d, lb), jnp.float32),   # normalized k
            pltpu.VMEM((tc, d, lb), jnp.float32),   # normalized v
            pltpu.VMEM((tc, d, lb), jnp.float32),   # sigmoid(lr)
        ],
        compiler_params=pltpu.CompilerParams(
            dimension_semantics=("parallel", "arbitrary")),
    )(q_p, k_p, v_p, lr_p)


# ----------------------------------------------------------------------------
# Full forward pass.
# ----------------------------------------------------------------------------
def init_params(key, D):
    ks = jax.random.split(key, 5)
    s = 1.0 / np.sqrt(D)

    def w(k):
        return jax.random.uniform(k, (D, D), jnp.float32, -s, s)

    return dict(
        Wq=w(ks[0]), Wk=w(ks[1]), Wv=w(ks[2]), Wout=w(ks[3]), Wlr=w(ks[4]),
        b_lr=jnp.zeros((D,), jnp.float32),  # nn.init.constant_(bias, 0)
    )


@functools.partial(jax.jit, static_argnames=("wm_head",))
def working_memory_forward(x, params, wm_head):
    B, T, D = x.shape
    H = wm_head
    d = D // H
    BH = B * H
    x2 = x.reshape(B * T, D)

    # Fused q/k/v/lr projection: a single (B*T, D) @ (D, 4D) tiled matmul.
    w_all = jnp.concatenate(
        [params["Wq"].T, params["Wk"].T, params["Wv"].T, params["Wlr"].T],
        axis=1)                                          # (D, 4D)
    b_all = jnp.concatenate(
        [jnp.zeros((3 * D,), jnp.float32), params["b_lr"]]).reshape(1, 4 * D)
    y = matmul_pallas(x2, w_all, b_all)                  # (B*T, 4D)

    # Lane-pack: (B*T, 4D) -> (4, T, d, B*H); the stream index b*H+h lands on
    # the lane axis so the recurrence is lane-dense.
    y_packed = (y.reshape(B, T, 4, H, d)
                 .transpose(2, 1, 4, 0, 3)
                 .reshape(4, T, d, BH))
    q_p, k_p, v_p, lr_p = y_packed[0], y_packed[1], y_packed[2], y_packed[3]

    o_packed = wm_recurrence_pallas(q_p, k_p, v_p, lr_p)  # (T, d, BH)

    # Unpack (T, d, B, H) -> (B, T, H, d) -> (B*T, D) and apply out projection.
    o2 = (o_packed.reshape(T, d, B, H)
                  .transpose(2, 0, 3, 1)
                  .reshape(B * T, D))
    out = matmul_pallas(o2, params["Wout"].T)             # no bias
    return out.reshape(B, T, D)


# ----------------------------------------------------------------------------
# Pure-JAX reference (mirrors the PyTorch forward exactly) for validation.
# ----------------------------------------------------------------------------
def reference_forward(x, params, wm_head):
    B, T, D = x.shape
    H = wm_head
    d = D // H
    q = x @ params["Wq"].T
    k = x @ params["Wk"].T
    v = x @ params["Wv"].T
    lr = jax.nn.sigmoid(x @ params["Wlr"].T + params["b_lr"])
    q = q.reshape(B, T, H, d)
    k = k.reshape(B, T, H, d)
    v = v.reshape(B, T, H, d)
    lr = lr.reshape(B, T, H, d)
    k = k / jnp.maximum(jnp.linalg.norm(k, axis=-1, keepdims=True), 1e-12)
    v = v / jnp.maximum(jnp.linalg.norm(v, axis=-1, keepdims=True), 1e-12)
    w = jnp.zeros((B, H, d, d), jnp.float32)
    outs = []
    for t in range(T):
        outs.append(jnp.einsum("bhi,bhij->bhj", q[:, t], w))
        pred = jnp.einsum("bhi,bhij->bhj", k[:, t], w)
        dw = jnp.einsum("bhi,bhj->bhij", k[:, t], v[:, t] - pred)
        dw = lr[:, t][:, :, None, :] * dw
        w = w + dw
    o = jnp.stack(outs, axis=1).reshape(B, T, D)
    return o @ params["Wout"].T


if __name__ == "__main__":
    B, T, D, H = 2, 8, 32, 4  # hidden_size=32, wm_head=4 -> wm_size d=8

    key = jax.random.PRNGKey(0)
    kx, kp = jax.random.split(key)
    x = jax.random.normal(kx, (B, T, D), jnp.float32)
    params = init_params(kp, D)

    out = working_memory_forward(x, params, H)
    out = jax.block_until_ready(out)

    ref = reference_forward(x, params, H)
    np.testing.assert_allclose(np.asarray(out), np.asarray(ref),
                               rtol=2e-3, atol=2e-4)

    print("KERNEL_OK")
</pallas_src>

<mosaic_0001>
module attributes {stable_mosaic.version = 11 : i64} {
  func.func @_matmul_bias_kernel(%arg0: i32, %arg1: i32, %arg2: i32, %arg3: memref<16x32xf32, #tpu.memory_space<vmem>>, %arg4: memref<32x128xf32, #tpu.memory_space<vmem>>, %arg5: memref<1x128xf32, #tpu.memory_space<vmem>>, %arg6: memref<16x128xf32, #tpu.memory_space<vmem>>, %arg7: memref<16x128xf32, #tpu.memory_space<vmem>>) attributes {dimension_semantics = [#tpu.dimension_semantics<parallel>, #tpu.dimension_semantics<parallel>, #tpu.dimension_semantics<arbitrary>], iteration_bounds = array<i64: 1, 1, 1>, scalar_prefetch = 0 : i64, scratch_operands = 1 : i64, tpu.core_type = #tpu.core_type<tc>, window_params = [{transform_indices = @transform_0, window_bounds = array<i64: 16, 32>}, {transform_indices = @transform_1, window_bounds = array<i64: 32, 128>}, {transform_indices = @transform_2, window_bounds = array<i64: 1, 128>}, {transform_indices = @transform_3, window_bounds = array<i64: 16, 128>}]} {
    %c0_i32 = arith.constant 0 : i32
    %0 = arith.cmpi eq, %arg2, %c0_i32 : i32
    %1 = arith.extui %0 : i1 to i32
    %c0_i32_0 = arith.constant 0 : i32
    %2 = arith.cmpi ne, %1, %c0_i32_0 : i32
    scf.if %2 {
      %cst_10 = arith.constant 0.000000e+00 : f32
      %12 = vector.broadcast %cst_10 : f32 to vector<16x128xf32>
      %c0_11 = arith.constant 0 : index
      %c0_12 = arith.constant 0 : index
      %13 = vector.load %arg7[%c0_11, %c0_12] : memref<16x128xf32, #tpu.memory_space<vmem>>, vector<16x128xf32>
      tpu.vector_store %arg7[%c0_11, %c0_12], %12 {strides = array<i32>} : memref<16x128xf32, #tpu.memory_space<vmem>>, vector<16x128xf32>,
    } else {
    }
    %c0 = arith.constant 0 : index
    %c0_1 = arith.constant 0 : index
    %3 = vector.load %arg7[%c0, %c0_1] : memref<16x128xf32, #tpu.memory_space<vmem>>, vector<16x128xf32>
    %c0_2 = arith.constant 0 : index
    %c0_3 = arith.constant 0 : index
    %4 = vector.load %arg3[%c0_2, %c0_3] : memref<16x32xf32, #tpu.memory_space<vmem>>, vector<16x32xf32>
    %c0_4 = arith.constant 0 : index
    %c0_5 = arith.constant 0 : index
    %5 = vector.load %arg4[%c0_4, %c0_5] : memref<32x128xf32, #tpu.memory_space<vmem>>, vector<32x128xf32>
    %cst = arith.constant dense<0.000000e+00> : vector<16x128xf32>
    %6 = tpu.matmul %4, %5, %cst {dimension_numbers = #tpu.dot_dimension_numbers<[1], [0], [0], [1], [0, 0, 1, 1], [], []>} : vector<16x32xf32>, vector<32x128xf32>, vector<16x128xf32> -> vector<16x128xf32>
    %7 = arith.addf %3, %6 : vector<16x128xf32>
    %c0_6 = arith.constant 0 : index
    %c0_7 = arith.constant 0 : index
    %8 = vector.load %arg7[%c0_6, %c0_7] : memref<16x128xf32, #tpu.memory_space<vmem>>, vector<16x128xf32>
    tpu.vector_store %arg7[%c0_6, %c0_7], %7 {strides = array<i32>} : memref<16x128xf32, #tpu.memory_space<vmem>>, vector<16x128xf32>,
    %c0_i32_8 = arith.constant 0 : i32
    %9 = arith.cmpi eq, %arg2, %c0_i32_8 : i32
    %10 = arith.extui %9 : i1 to i32
    %c0_i32_9 = arith.constant 0 : i32
    %11 = arith.cmpi ne, %10, %c0_i32_9 : i32
    scf.if %11 {
      %c0_10 = arith.constant 0 : index
      %c0_11 = arith.constant 0 : index
      %12 = vector.load %arg7[%c0_10, %c0_11] : memref<16x128xf32, #tpu.memory_space<vmem>>, vector<16x128xf32>
      %c0_12 = arith.constant 0 : index
      %c0_13 = arith.constant 0 : index
      %13 = vector.load %arg5[%c0_12, %c0_13] : memref<1x128xf32, #tpu.memory_space<vmem>>, vector<1x128xf32>
      %14 = vector.broadcast %13 : vector<1x128xf32> to vector<16x128xf32>
      %15 = arith.addf %12, %14 : vector<16x128xf32>
      %c0_14 = arith.constant 0 : index
      %c0_15 = arith.constant 0 : index
      %16 = vector.load %arg6[%c0_14, %c0_15] : memref<16x128xf32, #tpu.memory_space<vmem>>, vector<16x128xf32>
      tpu.vector_store %arg6[%c0_14, %c0_15], %15 {strides = array<i32>} : memref<16x128xf32, #tpu.memory_space<vmem>>, vector<16x128xf32>,
    } else {
    }
    return
  }
  func.func @transform_0(%arg0: i32, %arg1: i32, %arg2: i32) -> (i32, i32) {
    %c0_i32 = arith.constant 0 : i32
    return %arg0, %arg2 : i32, i32
  }
  func.func @transform_1(%arg0: i32, %arg1: i32, %arg2: i32) -> (i32, i32) {
    %c0_i32 = arith.constant 0 : i32
    return %arg2, %arg1 : i32, i32
  }
  func.func @transform_2(%arg0: i32, %arg1: i32, %arg2: i32) -> (i32, i32) {
    %c0_i32 = arith.constant 0 : i32
    %c0_i32_0 = arith.constant 0 : i32
    return %c0_i32, %arg1 : i32, i32
  }
  func.func @transform_3(%arg0: i32, %arg1: i32, %arg2: i32) -> (i32, i32) {
    %c0_i32 = arith.constant 0 : i32
    return %arg0, %arg1 : i32, i32
  }
}

module attributes {stable_mosaic.version = 11 : i64} {
  func.func @_wm_recurrence_kernel(%arg0: i32, %arg1: i32, %arg2: memref<8x8x8xf32, #tpu.memory_space<vmem>>, %arg3: memref<8x8x8xf32, #tpu.memory_space<vmem>>, %arg4: memref<8x8x8xf32, #tpu.memory_space<vmem>>, %arg5: memref<8x8x8xf32, #tpu.memory_space<vmem>>, %arg6: memref<8x8x8xf32, #tpu.memory_space<vmem>>, %arg7: memref<8x8x8xf32, #tpu.memory_space<vmem>>, %arg8: memref<8x8x8xf32, #tpu.memory_space<vmem>>, %arg9: memref<8x8x8xf32, #tpu.memory_space<vmem>>, %arg10: memref<8x8x8xf32, #tpu.memory_space<vmem>>) attributes {dimension_semantics = [#tpu.dimension_semantics<parallel>, #tpu.dimension_semantics<arbitrary>], iteration_bounds = array<i64: 1, 1>, scalar_prefetch = 0 : i64, scratch_operands = 4 : i64, tpu.core_type = #tpu.core_type<tc>, window_params = [{transform_indices = @transform_0, window_bounds = array<i64: 8, 8, 8>}, {transform_indices = @transform_1, window_bounds = array<i64: 8, 8, 8>}, {transform_indices = @transform_2, window_bounds = array<i64: 8, 8, 8>}, {transform_indices = @transform_3, window_bounds = array<i64: 8, 8, 8>}, {transform_indices = @transform_4, window_bounds = array<i64: 8, 8, 8>}]} {
    %c0_i32 = arith.constant 0 : i32
    %0 = arith.cmpi eq, %arg1, %c0_i32 : i32
    %1 = arith.extui %0 : i1 to i32
    %c0_i32_0 = arith.constant 0 : i32
    %2 = arith.cmpi ne, %1, %c0_i32_0 : i32
    scf.if %2 {
      %cst_30 = arith.constant 0.000000e+00 : f32
      %34 = vector.broadcast %cst_30 : f32 to vector<8x8x8xf32>
      %c0_31 = arith.constant 0 : index
      %c0_32 = arith.constant 0 : index
      %c0_33 = arith.constant 0 : index
      %35 = vector.load %arg7[%c0_31, %c0_32, %c0_33] : memref<8x8x8xf32, #tpu.memory_space<vmem>>, vector<8x8x8xf32>
      tpu.vector_store %arg7[%c0_31, %c0_32, %c0_33], %34 {strides = array<i32>} : memref<8x8x8xf32, #tpu.memory_space<vmem>>, vector<8x8x8xf32>,
    } else {
    }
    %c0 = arith.constant 0 : index
    %c0_1 = arith.constant 0 : index
    %c0_2 = arith.constant 0 : index
    %3 = vector.load %arg3[%c0, %c0_1, %c0_2] : memref<8x8x8xf32, #tpu.memory_space<vmem>>, vector<8x8x8xf32>
    %c0_3 = arith.constant 0 : index
    %c0_4 = arith.constant 0 : index
    %c0_5 = arith.constant 0 : index
    %4 = vector.load %arg4[%c0_3, %c0_4, %c0_5] : memref<8x8x8xf32, #tpu.memory_space<vmem>>, vector<8x8x8xf32>
    %5 = arith.mulf %3, %3 : vector<8x8x8xf32>
    %cst = arith.constant dense<0.000000e+00> : vector<8x8xf32>
    %6 = vector.multi_reduction <add>, %5, %cst [1] : vector<8x8x8xf32> to vector<8x8xf32>
    %7 = vector.shape_cast %6 : vector<8x8xf32> to vector<8x1x8xf32>
    %8 = math.sqrt %7 : vector<8x1x8xf32>
    %cst_6 = arith.constant 9.99999996E-13 : f32
    %9 = vector.broadcast %cst_6 : f32 to vector<8x1x8xf32>
    %10 = arith.maximumf %8, %9 : vector<8x1x8xf32>
    %11 = vector.broadcast %10 : vector<8x1x8xf32> to vector<8x8x8xf32>
    %12 = arith.divf %3, %11 : vector<8x8x8xf32>
    %c0_7 = arith.constant 0 : index
    %c0_8 = arith.constant 0 : index
    %c0_9 = arith.constant 0 : index
    %13 = vector.load %arg8[%c0_7, %c0_8, %c0_9] : memref<8x8x8xf32, #tpu.memory_space<vmem>>, vector<8x8x8xf32>
    tpu.vector_store %arg8[%c0_7, %c0_8, %c0_9], %12 {strides = array<i32>} : memref<8x8x8xf32, #tpu.memory_space<vmem>>, vector<8x8x8xf32>,
    %14 = arith.mulf %4, %4 : vector<8x8x8xf32>
    %cst_10 = arith.constant dense<0.000000e+00> : vector<8x8xf32>
    %15 = vector.multi_reduction <add>, %14, %cst_10 [1] : vector<8x8x8xf32> to vector<8x8xf32>
    %16 = vector.shape_cast %15 : vector<8x8xf32> to vector<8x1x8xf32>
    %17 = math.sqrt %16 : vector<8x1x8xf32>
    %cst_11 = arith.constant 9.99999996E-13 : f32
    %18 = vector.broadcast %cst_11 : f32 to vector<8x1x8xf32>
    %19 = arith.maximumf %17, %18 : vector<8x1x8xf32>
    %20 = vector.broadcast %19 : vector<8x1x8xf32> to vector<8x8x8xf32>
    %21 = arith.divf %4, %20 : vector<8x8x8xf32>
    %c0_12 = arith.constant 0 : index
    %c0_13 = arith.constant 0 : index
    %c0_14 = arith.constant 0 : index
    %22 = vector.load %arg9[%c0_12, %c0_13, %c0_14] : memref<8x8x8xf32, #tpu.memory_space<vmem>>, vector<8x8x8xf32>
    tpu.vector_store %arg9[%c0_12, %c0_13, %c0_14], %21 {strides = array<i32>} : memref<8x8x8xf32, #tpu.memory_space<vmem>>, vector<8x8x8xf32>,
    %c0_15 = arith.constant 0 : index
    %c0_16 = arith.constant 0 : index
    %c0_17 = arith.constant 0 : index
    %23 = vector.load %arg5[%c0_15, %c0_16, %c0_17] : memref<8x8x8xf32, #tpu.memory_space<vmem>>, vector<8x8x8xf32>
    %24 = arith.negf %23 : vector<8x8x8xf32>
    %25 = math.exp %24 : vector<8x8x8xf32>
    %cst_18 = arith.constant 1.000000e+00 : f32
    %26 = vector.broadcast %cst_18 : f32 to vector<8x8x8xf32>
    %27 = arith.addf %26, %25 : vector<8x8x8xf32>
    %28 = arith.divf %26, %27 : vector<8x8x8xf32>
    %c0_19 = arith.constant 0 : index
    %c0_20 = arith.constant 0 : index
    %c0_21 = arith.constant 0 : index
    %29 = vector.load %arg10[%c0_19, %c0_20, %c0_21] : memref<8x8x8xf32, #tpu.memory_space<vmem>>, vector<8x8x8xf32>
    tpu.vector_store %arg10[%c0_19, %c0_20, %c0_21], %28 {strides = array<i32>} : memref<8x8x8xf32, #tpu.memory_space<vmem>>, vector<8x8x8xf32>,
    %c0_22 = arith.constant 0 : index
    %c0_23 = arith.constant 0 : index
    %c0_24 = arith.constant 0 : index
    %30 = vector.load %arg7[%c0_22, %c0_23, %c0_24] : memref<8x8x8xf32, #tpu.memory_space<vmem>>, vector<8x8x8xf32>
    %c0_i32_25 = arith.constant 0 : i32
    %c8_i32 = arith.constant 8 : i32
    %31 = arith.addi %c0_i32_25, %c8_i32 : i32
    %c1_i32 = arith.constant 1 : i32
    %32 = scf.for %arg11 = %c0_i32_25 to %31 step %c1_i32 iter_args(%arg12 = %30) -> (vector<8x8x8xf32>)  : i32 {
      %34 = arith.index_cast %arg11 : i32 to index
      %c0_30 = arith.constant 0 : index
      %c0_31 = arith.constant 0 : index
      %35 = vector.load %arg2[%34, %c0_30, %c0_31] : memref<8x8x8xf32, #tpu.memory_space<vmem>>, vector<1x8x8xf32>
      %36 = vector.shape_cast %35 : vector<1x8x8xf32> to vector<8x8xf32>
      %37 = arith.index_cast %arg11 : i32 to index
      %c0_32 = arith.constant 0 : index
      %c0_33 = arith.constant 0 : index
      %38 = vector.load %arg8[%37, %c0_32, %c0_33] : memref<8x8x8xf32, #tpu.memory_space<vmem>>, vector<1x8x8xf32>
      %39 = vector.shape_cast %38 : vector<1x8x8xf32> to vector<8x8xf32>
      %40 = arith.index_cast %arg11 : i32 to index
      %c0_34 = arith.constant 0 : index
      %c0_35 = arith.constant 0 : index
      %41 = vector.load %arg9[%40, %c0_34, %c0_35] : memref<8x8x8xf32, #tpu.memory_space<vmem>>, vector<1x8x8xf32>
      %42 = vector.shape_cast %41 : vector<1x8x8xf32> to vector<8x8xf32>
      %43 = arith.index_cast %arg11 : i32 to index
      %c0_36 = arith.constant 0 : index
      %c0_37 = arith.constant 0 : index
      %44 = vector.load %arg10[%43, %c0_36, %c0_37] : memref<8x8x8xf32, #tpu.memory_space<vmem>>, vector<1x8x8xf32>
      %45 = vector.shape_cast %44 : vector<1x8x8xf32> to vector<8x8xf32>
      %46 = vector.shape_cast %36 : vector<8x8xf32> to vector<8x1x8xf32>
      %47 = vector.broadcast %46 : vector<8x1x8xf32> to vector<8x8x8xf32>
      %48 = arith.mulf %47, %arg12 : vector<8x8x8xf32>
      %cst_38 = arith.constant dense<0.000000e+00> : vector<8x8xf32>
      %49 = vector.multi_reduction <add>, %48, %cst_38 [0] : vector<8x8x8xf32> to vector<8x8xf32>
      %50 = arith.index_cast %arg11 : i32 to index
      %c0_39 = arith.constant 0 : index
      %c0_40 = arith.constant 0 : index
      %51 = vector.load %arg6[%50, %c0_39, %c0_40] : memref<8x8x8xf32, #tpu.memory_space<vmem>>, vector<1x8x8xf32>
      %52 = vector.shape_cast %51 : vector<1x8x8xf32> to vector<8x8xf32>
      %53 = vector.shape_cast %49 : vector<8x8xf32> to vector<1x8x8xf32>
      tpu.vector_store %arg6[%50, %c0_39, %c0_40], %53 {strides = array<i32>} : memref<8x8x8xf32, #tpu.memory_space<vmem>>, vector<1x8x8xf32>,
      %54 = vector.shape_cast %39 : vector<8x8xf32> to vector<8x1x8xf32>
      %55 = vector.broadcast %54 : vector<8x1x8xf32> to vector<8x8x8xf32>
      %56 = arith.mulf %55, %arg12 : vector<8x8x8xf32>
      %cst_41 = arith.constant dense<0.000000e+00> : vector<8x8xf32>
      %57 = vector.multi_reduction <add>, %56, %cst_41 [0] : vector<8x8x8xf32> to vector<8x8xf32>
      %58 = arith.subf %42, %57 : vector<8x8xf32>
      %59 = arith.mulf %45, %58 : vector<8x8xf32>
      %60 = vector.shape_cast %39 : vector<8x8xf32> to vector<8x1x8xf32>
      %61 = vector.shape_cast %59 : vector<8x8xf32> to vector<1x8x8xf32>
      %62 = vector.broadcast %60 : vector<8x1x8xf32> to vector<8x8x8xf32>
      %63 = vector.broadcast %61 : vector<1x8x8xf32> to vector<8x8x8xf32>
      %64 = arith.mulf %62, %63 : vector<8x8x8xf32>
      %65 = arith.addf %arg12, %64 : vector<8x8x8xf32>
      scf.yield %65 : vector<8x8x8xf32>
    }
    %c8_i32_26 = arith.constant 8 : i32
    %c0_27 = arith.constant 0 : index
    %c0_28 = arith.constant 0 : index
    %c0_29 = arith.constant 0 : index
    %33 = vector.load %arg7[%c0_27, %c0_28, %c0_29] : memref<8x8x8xf32, #tpu.memory_space<vmem>>, vector<8x8x8xf32>
    tpu.vector_store %arg7[%c0_27, %c0_28, %c0_29], %32 {strides = array<i32>} : memref<8x8x8xf32, #tpu.memory_space<vmem>>, vector<8x8x8xf32>,
    return
  }
  func.func @transform_0(%arg0: i32, %arg1: i32) -> (i32, i32, i32) {
    %c0_i32 = arith.constant 0 : i32
    %c0_i32_0 = arith.constant 0 : i32
    return %arg1, %c0_i32, %arg0 : i32, i32, i32
  }
  func.func @transform_1(%arg0: i32, %arg1: i32) -> (i32, i32, i32) {
    %c0_i32 = arith.constant 0 : i32
    %c0_i32_0 = arith.constant 0 : i32
    return %arg1, %c0_i32, %arg0 : i32, i32, i32
  }
  func.func @transform_2(%arg0: i32, %arg1: i32) -> (i32, i32, i32) {
    %c0_i32 = arith.constant 0 : i32
    %c0_i32_0 = arith.constant 0 : i32
    return %arg1, %c0_i32, %arg0 : i32, i32, i32
  }
  func.func @transform_3(%arg0: i32, %arg1: i32) -> (i32, i32, i32) {
    %c0_i32 = arith.constant 0 : i32
    %c0_i32_0 = arith.constant 0 : i32
    return %arg1, %c0_i32, %arg0 : i32, i32, i32
  }
  func.func @transform_4(%arg0: i32, %arg1: i32) -> (i32, i32, i32) {
    %c0_i32 = arith.constant 0 : i32
    %c0_i32_0 = arith.constant 0 : i32
    return %arg1, %c0_i32, %arg0 : i32, i32, i32
  }
}

module attributes {stable_mosaic.version = 11 : i64} {
  func.func @_matmul_kernel(%arg0: i32, %arg1: i32, %arg2: i32, %arg3: memref<16x32xf32, #tpu.memory_space<vmem>>, %arg4: memref<32x32xf32, #tpu.memory_space<vmem>>, %arg5: memref<16x32xf32, #tpu.memory_space<vmem>>, %arg6: memref<16x32xf32, #tpu.memory_space<vmem>>) attributes {dimension_semantics = [#tpu.dimension_semantics<parallel>, #tpu.dimension_semantics<parallel>, #tpu.dimension_semantics<arbitrary>], iteration_bounds = array<i64: 1, 1, 1>, scalar_prefetch = 0 : i64, scratch_operands = 1 : i64, tpu.core_type = #tpu.core_type<tc>, window_params = [{transform_indices = @transform_0, window_bounds = array<i64: 16, 32>}, {transform_indices = @transform_1, window_bounds = array<i64: 32, 32>}, {transform_indices = @transform_2, window_bounds = array<i64: 16, 32>}]} {
    %c0_i32 = arith.constant 0 : i32
    %0 = arith.cmpi eq, %arg2, %c0_i32 : i32
    %1 = arith.extui %0 : i1 to i32
    %c0_i32_0 = arith.constant 0 : i32
    %2 = arith.cmpi ne, %1, %c0_i32_0 : i32
    scf.if %2 {
      %cst_10 = arith.constant 0.000000e+00 : f32
      %12 = vector.broadcast %cst_10 : f32 to vector<16x32xf32>
      %c0_11 = arith.constant 0 : index
      %c0_12 = arith.constant 0 : index
      %13 = vector.load %arg6[%c0_11, %c0_12] : memref<16x32xf32, #tpu.memory_space<vmem>>, vector<16x32xf32>
      tpu.vector_store %arg6[%c0_11, %c0_12], %12 {strides = array<i32>} : memref<16x32xf32, #tpu.memory_space<vmem>>, vector<16x32xf32>,
    } else {
    }
    %c0 = arith.constant 0 : index
    %c0_1 = arith.constant 0 : index
    %3 = vector.load %arg6[%c0, %c0_1] : memref<16x32xf32, #tpu.memory_space<vmem>>, vector<16x32xf32>
    %c0_2 = arith.constant 0 : index
    %c0_3 = arith.constant 0 : index
    %4 = vector.load %arg3[%c0_2, %c0_3] : memref<16x32xf32, #tpu.memory_space<vmem>>, vector<16x32xf32>
    %c0_4 = arith.constant 0 : index
    %c0_5 = arith.constant 0 : index
    %5 = vector.load %arg4[%c0_4, %c0_5] : memref<32x32xf32, #tpu.memory_space<vmem>>, vector<32x32xf32>
    %cst = arith.constant dense<0.000000e+00> : vector<16x32xf32>
    %6 = tpu.matmul %4, %5, %cst {dimension_numbers = #tpu.dot_dimension_numbers<[1], [0], [0], [1], [0, 0, 1, 1], [], []>} : vector<16x32xf32>, vector<32x32xf32>, vector<16x32xf32> -> vector<16x32xf32>
    %7 = arith.addf %3, %6 : vector<16x32xf32>
    %c0_6 = arith.constant 0 : index
    %c0_7 = arith.constant 0 : index
    %8 = vector.load %arg6[%c0_6, %c0_7] : memref<16x32xf32, #tpu.memory_space<vmem>>, vector<16x32xf32>
    tpu.vector_store %arg6[%c0_6, %c0_7], %7 {strides = array<i32>} : memref<16x32xf32, #tpu.memory_space<vmem>>, vector<16x32xf32>,
    %c0_i32_8 = arith.constant 0 : i32
    %9 = arith.cmpi eq, %arg2, %c0_i32_8 : i32
    %10 = arith.extui %9 : i1 to i32
    %c0_i32_9 = arith.constant 0 : i32
    %11 = arith.cmpi ne, %10, %c0_i32_9 : i32
    scf.if %11 {
      %c0_10 = arith.constant 0 : index
      %c0_11 = arith.constant 0 : index
      %12 = vector.load %arg6[%c0_10, %c0_11] : memref<16x32xf32, #tpu.memory_space<vmem>>, vector<16x32xf32>
      %c0_12 = arith.constant 0 : index
      %c0_13 = arith.constant 0 : index
      %13 = vector.load %arg5[%c0_12, %c0_13] : memref<16x32xf32, #tpu.memory_space<vmem>>, vector<16x32xf32>
      tpu.vector_store %arg5[%c0_12, %c0_13], %12 {strides = array<i32>} : memref<16x32xf32, #tpu.memory_space<vmem>>, vector<16x32xf32>,
    } else {
    }
    return
  }
  func.func @transform_0(%arg0: i32, %arg1: i32, %arg2: i32) -> (i32, i32) {
    %c0_i32 = arith.constant 0 : i32
    return %arg0, %arg2 : i32, i32
  }
  func.func @transform_1(%arg0: i32, %arg1: i32, %arg2: i32) -> (i32, i32) {
    %c0_i32 = arith.constant 0 : i32
    return %arg2, %arg1 : i32, i32
  }
  func.func @transform_2(%arg0: i32, %arg1: i32, %arg2: i32) -> (i32, i32) {
    %c0_i32 = arith.constant 0 : i32
    return %arg0, %arg1 : i32, i32
  }
}

</mosaic_0001>

<llo_original>
// kernel: working_memory_forward.3
$region0: #{working_memory_forward.3}
  #allocation0 [shape = 'u32[]', space=smem, size = 0x4, offset = 0x4, fixed_abs, tag = 'smem constant byte address 0x4 - core index']
  #allocation1 [shape = 'u32[72,128]{1,0:T(1,128)}', space=vmem, size = 0x9000, scoped, tag = 'internal scratch']
  #allocation2 [shape = 'f32[16,128]{1,0:T(8,128)}', space=vmem, size = 0x2000, scoped, tag = 'scratch operand']
  %s0 = inlined_call_operand.vmem [shape: f32[16,32], index: 0, kind: input, shape index: {}]
  %s1 = inlined_call_operand.vmem [shape: f32[32,128], index: 1, kind: input, shape index: {}]
  %s2 = inlined_call_operand.vmem [shape: f32[1,128], index: 2, kind: input, shape index: {}]
  %s3 = inlined_call_operand.vmem [shape: f32[16,128], index: 3, kind: output, shape index: {}]
  %s4 = sld [smem:[#allocation0]]
  $region30: #{working_memory_forward.3} parent=0
    _
  %s6 = ssub.s32 1, %s4
  %s7 = scalar_select 0, %s6, %s4
  // Predicated region
  $region2: #{working_memory_forward.3} parent=0 // pred_check
    _
  $region3: #{working_memory_forward.3} parent=0 // pred_check_branch
    %9 = sbr.rel (0) target = $region5
  $region4: #{working_memory_forward.3} parent=0 // pred_region
    _
  $region5: #{working_memory_forward.3} parent=0 // pred_fallthru
    _
  // Predicated region
  $region6: #{working_memory_forward.3} parent=0 // pred_check
    _
  $region7: #{working_memory_forward.3} parent=0 // pred_check_branch
    %11 = sbr.rel (0) target = $region9
  $region8: #{working_memory_forward.3} parent=0 // pred_region
    _
  $region9: #{working_memory_forward.3} parent=0 // pred_fallthru
    _
  // Predicated region
  $region10: #{working_memory_forward.3} parent=0 // pred_check
    _
  $region11: #{working_memory_forward.3} parent=0 // pred_check_branch
    %13 = sbr.rel (0) target = $region13
  $region12: #{working_memory_forward.3} parent=0 // pred_region
    _
  $region13: #{working_memory_forward.3} parent=0 // pred_fallthru
    _
  %p14 = scmp.eq.s32.totalorder 0, 0
  // Predicated region
  $region14: #{working_memory_forward.3} parent=0 // pred_check
    %p15 = pneg %p14
  $region15: #{working_memory_forward.3} parent=0 // pred_check_branch
    %17 = sbr.rel (%p15) target = $region17
  $region16: #{working_memory_forward.3} parent=0 // pred_region
    %18 = vst [vmem:[#allocation2] sm:$0xff] 0.0
    %19 = vst [vmem:[#allocation2 + $0x8] sm:$0xff] 0.0
  $region17: #{working_memory_forward.3} parent=0 // pred_fallthru
    _
  %v20 = vld [vmem:[#allocation2] sm:$0xff]
  %v21 = vld [vmem:[#allocation2 + $0x8] sm:$0xff]
  %v22 = vld [vmem:[%s0] sm:$0xff]
  %v23 = vld [vmem:[%s0 + $0x8] sm:$0xff]
  %v24 = vld [vmem:[%s1] sm:$0xff]
  %v25 = vld [vmem:[%s1 + $0x8] sm:$0xff]
  %v26 = vld [vmem:[%s1 + $0x10] sm:$0xff]
  %v27 = vld [vmem:[%s1 + $0x18] sm:$0xff]
  %vm28 = vcmask 261120
  %v30 = vsel %vm28, %v22, 0
  %v33 = vsel %vm28, %v23, 0
  %35 = vmatpush.msra.mxu0 0.0
  %36 = vmatpush.msra.mxu0 0.0
  %37 = vmatpush.msra.mxu0 0.0
  %38 = vmatpush.msra.mxu0 0.0
  %39 = vmatpush.msra.mxu0 0.0
  %40 = vmatpush.msra.mxu0 0.0
  %41 = vmatpush.msra.mxu0 0.0
  %42 = vmatpush.msra.mxu0 0.0
  %43 = vmatpush.msra.mxu0 0.0
  %44 = vmatpush.msra.mxu0 0.0
  %45 = vmatpush.msra.mxu0 0.0
  %46 = vmatpush.msra.mxu0 0.0
  %47 = vmatpush.msra.mxu0 %v27
  %48 = vmatpush.msra.mxu0 %v26
  %49 = vmatpush.msra.mxu0 %v25
  %50 = vmatpush.msra.mxu0 %v24
  %51 = vmatmul.f32.gmra.mxu0 %v30
  %v52 = vpop.f32.mrf.mxu0
  %v53 = vadd.f32 0.0, %v52
  %54 = vmatmul.f32.gmra.mxu0 %v33
  %v55 = vpop.f32.mrf.mxu0
  %v56 = vadd.f32 0.0, %v55
  %57 = vdwg.mxu0
  %v58 = vadd.f32 %v20, %v53
  %v59 = vadd.f32 %v21, %v56
  %60 = vst [vmem:[#allocation2] sm:$0xff] %v58
  %61 = vst [vmem:[#allocation2 + $0x8] sm:$0xff] %v59
  // Predicated region
  $region18: #{working_memory_forward.3} parent=0 // pred_check
    %p62 = pneg %p14
  $region19: #{working_memory_forward.3} parent=0 // pred_check_branch
    %64 = sbr.rel (%p62) target = $region21
  $region20: #{working_memory_forward.3} parent=0 // pred_region
    %v65 = vld [vmem:[#allocation2] sm:$0xff]
    %v66 = vld [vmem:[#allocation2 + $0x8] sm:$0xff]
    %v67 = vld [vmem:[%s2] sm:$0x1]
    %v69 = vperm.slane %v67, 0
    %v71 = vadd.f32 %v65, %v69
    %v72 = vadd.f32 %v66, %v69
    %73 = vst [vmem:[%s3] sm:$0xff] %v71
    %74 = vst [vmem:[%s3 + $0x8] sm:$0xff] %v72
  $region21: #{working_memory_forward.3} parent=0 // pred_fallthru
    _
  // Predicated region
  $region22: #{working_memory_forward.3} parent=0 // pred_check
    _
  $region23: #{working_memory_forward.3} parent=0 // pred_check_branch
    %76 = sbr.rel (0) target = $region25
  $region24: #{working_memory_forward.3} parent=0 // pred_region
    _
  $region25: #{working_memory_forward.3} parent=0 // pred_fallthru
    _
  // Predicated region
  $region26: #{working_memory_forward.3} parent=0 // pred_check
    _
  $region27: #{working_memory_forward.3} parent=0 // pred_check_branch
    %78 = sbr.rel (0) target = $region29
  $region28: #{working_memory_forward.3} parent=0 // pred_region
    _
  $region29: #{working_memory_forward.3} parent=0 // pred_fallthru
    _

// kernel: working_memory_forward.5
$region0: #{working_memory_forward.5}
  #allocation0 [shape = 'u32[]', space=smem, size = 0x4, offset = 0x4, fixed_abs, tag = 'smem constant byte address 0x4 - core index']
  #allocation1 [shape = 'u32[72,128]{1,0:T(1,128)}', space=vmem, size = 0x9000, scoped, tag = 'internal scratch']
  #allocation2 [shape = 'f32[16,32]{1,0:T(8,128)}', space=vmem, size = 0x2000, scoped, tag = 'scratch operand']
  %s0 = inlined_call_operand.vmem [shape: f32[16,32], index: 0, kind: input, shape index: {}]
  %s1 = inlined_call_operand.vmem [shape: f32[32,32], index: 1, kind: input, shape index: {}]
  %s2 = inlined_call_operand.hbm [shape: f32[16,32], index: 2, kind: output, shape index: {}]
  %s3 = sld [smem:[#allocation0]]
  $region26: #{working_memory_forward.5} parent=0
    _
  %s5 = ssub.s32 1, %s3
  %s6 = scalar_select 0, %s5, %s3
  $region1: #{working_memory_forward.5} parent=0
    #allocation3 [shape = 'u8[8192]{0}', space=vmem, size = 0x2000, scoped, tag = 'output window, operand 0, single buffered']
    #allocation4 [shape = 's32[1]{0}', space=sflag, size = 0x4, scoped, tag = 'scoped memory for working_memory_forward.5']
    %7 = vsyncpa [#allocation4], 0
    // Predicated region
    $region2: #{working_memory_forward.5} parent=1 // pred_check
      _
    $region3: #{working_memory_forward.5} parent=1 // pred_check_branch
      %9 = sbr.rel (0) target = $region5
    $region4: #{working_memory_forward.5} parent=1 // pred_region
      _
    $region5: #{working_memory_forward.5} parent=1 // pred_fallthru
      _
    // Predicated region
    $region6: #{working_memory_forward.5} parent=1 // pred_check
      _
    $region7: #{working_memory_forward.5} parent=1 // pred_check_branch
      %11 = sbr.rel (0) target = $region9
    $region8: #{working_memory_forward.5} parent=1 // pred_region
      _
    $region9: #{working_memory_forward.5} parent=1 // pred_fallthru
      _
    %p12 = scmp.eq.s32.totalorder 0, 0
    // Predicated region
    $region10: #{working_memory_forward.5} parent=1 // pred_check
      %p13 = pneg %p12
    $region11: #{working_memory_forward.5} parent=1 // pred_check_branch
      %15 = sbr.rel (%p13) target = $region13
    $region12: #{working_memory_forward.5} parent=1 // pred_region
      %vm16 = vcmask 261120
      %17 = vst.msk [vmem:[#allocation2] sm:$0xff] %vm16, 0.0
      %18 = vst.msk [vmem:[#allocation2 + $0x8] sm:$0xff] %vm16, 0.0
    $region13: #{working_memory_forward.5} parent=1 // pred_fallthru
      _
    %v19 = vld [vmem:[#allocation2] sm:$0xff]
    %v20 = vld [vmem:[#allocation2 + $0x8] sm:$0xff]
    %v21 = vld [vmem:[%s0] sm:$0xff]
    %v22 = vld [vmem:[%s0 + $0x8] sm:$0xff]
    %v23 = vld [vmem:[%s1] sm:$0xff]
    %v24 = vld [vmem:[%s1 + $0x8] sm:$0xff]
    %v25 = vld [vmem:[%s1 + $0x10] sm:$0xff]
    %v26 = vld [vmem:[%s1 + $0x18] sm:$0xff]
    %vm27 = vcmask 261120
    %v29 = vsel %vm27, %v21, 0
    %v32 = vsel %vm27, %v22, 0
    %34 = vmatpush.msra.mxu0 0.0
    %35 = vmatpush.msra.mxu0 0.0
    %36 = vmatpush.msra.mxu0 0.0
    %37 = vmatpush.msra.mxu0 0.0
    %38 = vmatpush.msra.mxu0 0.0
    %39 = vmatpush.msra.mxu0 0.0
    %40 = vmatpush.msra.mxu0 0.0
    %41 = vmatpush.msra.mxu0 0.0
    %42 = vmatpush.msra.mxu0 0.0
    %43 = vmatpush.msra.mxu0 0.0
    %44 = vmatpush.msra.mxu0 0.0
    %45 = vmatpush.msra.mxu0 0.0
    %46 = vmatpush.msra.mxu0 %v26
    %47 = vmatpush.msra.mxu0 %v25
    %48 = vmatpush.msra.mxu0 %v24
    %49 = vmatpush.msra.mxu0 %v23
    %50 = vmatmul.f32.gmra.mxu0 %v29
    %v51 = vpop.f32.mrf.mxu0
    %v52 = vadd.f32 0.0, %v51
    %53 = vmatmul.f32.gmra.mxu0 %v32
    %v54 = vpop.f32.mrf.mxu0
    %v55 = vadd.f32 0.0, %v54
    %56 = vdwg.mxu0
    %v57 = vadd.f32 %v19, %v52
    %v58 = vadd.f32 %v20, %v55
    %59 = vst.msk [vmem:[#allocation2] sm:$0xff] %vm27, %v57
    %60 = vst.msk [vmem:[#allocation2 + $0x8] sm:$0xff] %vm27, %v58
    // Predicated region
    $region14: #{working_memory_forward.5} parent=1 // pred_check
      %p61 = pneg %p12
    $region15: #{working_memory_forward.5} parent=1 // pred_check_branch
      %63 = sbr.rel (%p61) target = $region17
    $region16: #{working_memory_forward.5} parent=1 // pred_region
      %v64 = vld [vmem:[#allocation2] sm:$0xff]
      %v65 = vld [vmem:[#allocation2 + $0x8] sm:$0xff]
      %66 = vst.msk [vmem:[#allocation3] sm:$0xff] %vm27, %v64
      %67 = vst.msk [vmem:[#allocation3 + $0x8] sm:$0xff] %vm27, %v65
    $region17: #{working_memory_forward.5} parent=1 // pred_fallthru
      _
    // Predicated region
    $region18: #{working_memory_forward.5} parent=1 // pred_check
      _
    $region19: #{working_memory_forward.5} parent=1 // pred_check_branch
      %69 = sbr.rel (0) target = $region21
    $region20: #{working_memory_forward.5} parent=1 // pred_region
      %71 = vsyncadd [#allocation4], 0
      %s72 = sshll.u32 [#allocation3], 4
      %s73 = int_to_ptr.vmem [resolvable:$true] %s72
      %s74 = sshll.u32 %s2, 4
      %s75 = int_to_ptr.hbm [resolvable:$true] %s74
      %80 = dma.vmem_to_hbm [thread:$0]  %s73, 256, %s75, [#allocation4], 128, 128, 8
    $region21: #{working_memory_forward.5} parent=1 // pred_fallthru
      _
    // Predicated region
    $region22: #{working_memory_forward.5} parent=1 // pred_check
      _
    $region23: #{working_memory_forward.5} parent=1 // pred_check_branch
      %82 = sbr.rel (0) target = $region25
    $region24: #{working_memory_forward.5} parent=1 // pred_region
      %84 = dma.done [#allocation4], 256
    $region25: #{working_memory_forward.5} parent=1 // pred_fallthru
      _
    %85 = vsyncpa [#allocation4], 1

// kernel: working_memory_forward.4
$region0: #{working_memory_forward.4}
  #allocation0 [shape = 'u32[]', space=smem, size = 0x4, offset = 0x4, fixed_abs, tag = 'smem constant byte address 0x4 - core index']
  #allocation1 [shape = 'u32[72,128]{1,0:T(1,128)}', space=vmem, size = 0x9000, scoped, tag = 'internal scratch']
  #allocation2 [shape = 'f32[8,8,8]{2,1,0:T(8,128)}', space=vmem, size = 0x8000, scoped, tag = 'scratch operand']
  #allocation3 [shape = 'f32[8,8,8]{2,1,0:T(8,128)}', space=vmem, size = 0x8000, scoped, tag = 'scratch operand']
  #allocation4 [shape = 'f32[8,8,8]{2,1,0:T(8,128)}', space=vmem, size = 0x8000, scoped, tag = 'scratch operand']
  #allocation5 [shape = 'f32[8,8,8]{2,1,0:T(8,128)}', space=vmem, size = 0x8000, scoped, tag = 'scratch operand']
  %s0 = inlined_call_operand.vmem [shape: f32[8,8,8], index: 0, kind: input, shape index: {}]
  %s1 = inlined_call_operand.vmem [shape: f32[8,8,8], index: 1, kind: input, shape index: {}]
  %s2 = inlined_call_operand.vmem [shape: f32[8,8,8], index: 2, kind: input, shape index: {}]
  %s3 = inlined_call_operand.vmem [shape: f32[8,8,8], index: 3, kind: input, shape index: {}]
  %s4 = inlined_call_operand.vmem [shape: f32[8,8,8], index: 4, kind: output, shape index: {}]
  %s5 = sld [smem:[#allocation0]]
  $region37: #{working_memory_forward.4} parent=0
    _
  %s7 = ssub.s32 1, %s5
  %s8 = scalar_select 0, %s7, %s5
  // Predicated region
  $region2: #{working_memory_forward.4} parent=0 // pred_check
    _
  $region3: #{working_memory_forward.4} parent=0 // pred_check_branch
    %10 = sbr.rel (0) target = $region5
  $region4: #{working_memory_forward.4} parent=0 // pred_region
    _
  $region5: #{working_memory_forward.4} parent=0 // pred_fallthru
    _
  // Predicated region
  $region6: #{working_memory_forward.4} parent=0 // pred_check
    _
  $region7: #{working_memory_forward.4} parent=0 // pred_check_branch
    %12 = sbr.rel (0) target = $region9
  $region8: #{working_memory_forward.4} parent=0 // pred_region
    _
  $region9: #{working_memory_forward.4} parent=0 // pred_fallthru
    _
  // Predicated region
  $region10: #{working_memory_forward.4} parent=0 // pred_check
    _
  $region11: #{working_memory_forward.4} parent=0 // pred_check_branch
    %14 = sbr.rel (0) target = $region13
  $region12: #{working_memory_forward.4} parent=0 // pred_region
    _
  $region13: #{working_memory_forward.4} parent=0 // pred_fallthru
    _
  // Predicated region
  $region14: #{working_memory_forward.4} parent=0 // pred_check
    _
  $region15: #{working_memory_forward.4} parent=0 // pred_check_branch
    %16 = sbr.rel (0) target = $region17
  $region16: #{working_memory_forward.4} parent=0 // pred_region
    _
  $region17: #{working_memory_forward.4} parent=0 // pred_fallthru
    _
  %p17 = scmp.eq.s32.totalorder 0, 0
  // Predicated region
  $region18: #{working_memory_forward.4} parent=0 // pred_check
    %p18 = pneg %p17
  $region19: #{working_memory_forward.4} parent=0 // pred_check_branch
    %20 = sbr.rel (%p18) target = $region21
  $region20: #{working_memory_forward.4} parent=0 // pred_region
    %vm21 = vcmask 64512
    %22 = vst.msk [vmem:[#allocation2] sm:$0xff] %vm21, 0.0
    %23 = vst.msk [vmem:[#allocation2 + $0x8] sm:$0xff] %vm21, 0.0
    %24 = vst.msk [vmem:[#allocation2 + $0x10] sm:$0xff] %vm21, 0.0
    %25 = vst.msk [vmem:[#allocation2 + $0x18] sm:$0xff] %vm21, 0.0
    %26 = vst.msk [vmem:[#allocation2 + $0x20] sm:$0xff] %vm21, 0.0
    %27 = vst.msk [vmem:[#allocation2 + $0x28] sm:$0xff] %vm21, 0.0
    %28 = vst.msk [vmem:[#allocation2 + $0x30] sm:$0xff] %vm21, 0.0
    %29 = vst.msk [vmem:[#allocation2 + $0x38] sm:$0xff] %vm21, 0.0
  $region21: #{working_memory_forward.4} parent=0 // pred_fallthru
    _
  %v30 = vld [vmem:[%s1] sm:$0xff]
  %v31 = vld [vmem:[%s1 + $0x8] sm:$0xff]
  %v32 = vld [vmem:[%s1 + $0x10] sm:$0xff]
  %v33 = vld [vmem:[%s1 + $0x18] sm:$0xff]
  %v34 = vld [vmem:[%s1 + $0x20] sm:$0xff]
  %v35 = vld [vmem:[%s1 + $0x28] sm:$0xff]
  %v36 = vld [vmem:[%s1 + $0x30] sm:$0xff]
  %v37 = vld [vmem:[%s1 + $0x38] sm:$0xff]
  %v38 = vld [vmem:[%s2] sm:$0xff]
  %v39 = vld [vmem:[%s2 + $0x8] sm:$0xff]
  %v40 = vld [vmem:[%s2 + $0x10] sm:$0xff]
  %v41 = vld [vmem:[%s2 + $0x18] sm:$0xff]
  %v42 = vld [vmem:[%s2 + $0x20] sm:$0xff]
  %v43 = vld [vmem:[%s2 + $0x28] sm:$0xff]
  %v44 = vld [vmem:[%s2 + $0x30] sm:$0xff]
  %v45 = vld [vmem:[%s2 + $0x38] sm:$0xff]
  %v46 = vmul.f32 %v30, %v30
  %v47 = vmul.f32 %v31, %v31
  %v48 = vmul.f32 %v32, %v32
  %v49 = vmul.f32 %v33, %v33
  %v50 = vmul.f32 %v34, %v34
  %v51 = vmul.f32 %v35, %v35
  %v52 = vmul.f32 %v36, %v36
  %v53 = vmul.f32 %v37, %v37
  %vm54 = vcmask 64512
  %v55 = vsel %vm54, %v46, 0.0
  %v56 = vrot.slane %v55, 4
  %v57 = vadd.f32 %v55, %v56
  %v58 = vrot.slane %v57, 2
  %v59 = vadd.f32 %v57, %v58
  %v60 = vrot.slane %v59, 1
  %v61 = vadd.f32 %v59, %v60
  %v62 = vsel %vm54, %v47, 0.0
  %v63 = vrot.slane %v62, 4
  %v64 = vadd.f32 %v62, %v63
  %v65 = vrot.slane %v64, 2
  %v66 = vadd.f32 %v64, %v65
  %v67 = vrot.slane %v66, 1
  %v68 = vadd.f32 %v66, %v67
  %v69 = vsel %vm54, %v48, 0.0
  %v70 = vrot.slane %v69, 4
  %v71 = vadd.f32 %v69, %v70
  %v72 = vrot.slane %v71, 2
  %v73 = vadd.f32 %v71, %v72
  %v74 = vrot.slane %v73, 1
  %v75 = vadd.f32 %v73, %v74
  %v76 = vsel %vm54, %v49, 0.0
  %v77 = vrot.slane %v76, 4
  %v78 = vadd.f32 %v76, %v77
  %v79 = vrot.slane %v78, 2
  %v80 = vadd.f32 %v78, %v79
  %v81 = vrot.slane %v80, 1
  %v82 = vadd.f32 %v80, %v81
  %v83 = vsel %vm54, %v50, 0.0
  %v84 = vrot.slane %v83, 4
  %v85 = vadd.f32 %v83, %v84
  %v86 = vrot.slane %v85, 2
  %v87 = vadd.f32 %v85, %v86
  %v88 = vrot.slane %v87, 1
  %v89 = vadd.f32 %v87, %v88
  %v90 = vsel %vm54, %v51, 0.0
  %v91 = vrot.slane %v90, 4
  %v92 = vadd.f32 %v90, %v91
  %v93 = vrot.slane %v92, 2
  %v94 = vadd.f32 %v92, %v93
  %v95 = vrot.slane %v94, 1
  %v96 = vadd.f32 %v94, %v95
  %v97 = vsel %vm54, %v52, 0.0
  %v98 = vrot.slane %v97, 4
  %v99 = vadd.f32 %v97, %v98
  %v100 = vrot.slane %v99, 2
  %v101 = vadd.f32 %v99, %v100
  %v102 = vrot.slane %v101, 1
  %v103 = vadd.f32 %v101, %v102
  %v104 = vsel %vm54, %v53, 0.0
  %v105 = vrot.slane %v104, 4
  %v106 = vadd.f32 %v104, %v105
  %v107 = vrot.slane %v106, 2
  %v108 = vadd.f32 %v106, %v107
  %v109 = vrot.slane %v108, 1
  %v110 = vadd.f32 %v108, %v109
  %v111 = vrsqrt.pop %v61
  %v112 = vmul.f32 %v111, %v61
  %v113 = vmul.f32 %v112, %v111
  %v114 = vmul.f32 0.5, %v113
  %v115 = vsub.f32 1.5, %v114
  %v116 = vmul.f32 %v111, %v115
  %v117 = vmul.f32 %v61, %v116
  %vm118 = vcmp.eq.f32.partialorder %v61, inf
  %v119 = vsel %vm118, %v61, %v117
  %vm120 = vcmp.eq.f32.partialorder %v61, 0.0
  %v121 = vand.u32 %v61, 2147483648
  %v122 = vsel %vm120, %v121, %v119
  %v123 = vrsqrt.pop %v68
  %v124 = vmul.f32 %v123, %v68
  %v125 = vmul.f32 %v124, %v123
  %v126 = vmul.f32 0.5, %v125
  %v127 = vsub.f32 1.5, %v126
  %v128 = vmul.f32 %v123, %v127
  %v129 = vmul.f32 %v68, %v128
  %vm130 = vcmp.eq.f32.partialorder %v68, inf
  %v131 = vsel %vm130, %v68, %v129
  %vm132 = vcmp.eq.f32.partialorder %v68, 0.0
  %v133 = vand.u32 %v68, 2147483648
  %v134 = vsel %vm132, %v133, %v131
  %v135 = vrsqrt.pop %v75
  %v136 = vmul.f32 %v135, %v75
  %v137 = vmul.f32 %v136, %v135
  %v138 = vmul.f32 0.5, %v137
  %v139 = vsub.f32 1.5, %v138
  %v140 = vmul.f32 %v135, %v139
  %v141 = vmul.f32 %v75, %v140
  %vm142 = vcmp.eq.f32.partialorder %v75, inf
  %v143 = vsel %vm142, %v75, %v141
  %vm144 = vcmp.eq.f32.partialorder %v75, 0.0
  %v145 = vand.u32 %v75, 2147483648
  %v146 = vsel %vm144, %v145, %v143
  %v147 = vrsqrt.pop %v82
  %v148 = vmul.f32 %v147, %v82
  %v149 = vmul.f32 %v148, %v147
  %v150 = vmul.f32 0.5, %v149
  %v151 = vsub.f32 1.5, %v150
  %v152 = vmul.f32 %v147, %v151
  %v153 = vmul.f32 %v82, %v152
  %vm154 = vcmp.eq.f32.partialorder %v82, inf
  %v155 = vsel %vm154, %v82, %v153
  %vm156 = vcmp.eq.f32.partialorder %v82, 0.0
  %v157 = vand.u32 %v82, 2147483648
  %v158 = vsel %vm156, %v157, %v155
  %v159 = vrsqrt.pop %v89
  %v160 = vmul.f32 %v159, %v89
  %v161 = vmul.f32 %v160, %v159
  %v162 = vmul.f32 0.5, %v161
  %v163 = vsub.f32 1.5, %v162
  %v164 = vmul.f32 %v159, %v163
  %v165 = vmul.f32 %v89, %v164
  %vm166 = vcmp.eq.f32.partialorder %v89, inf
  %v167 = vsel %vm166, %v89, %v165
  %vm168 = vcmp.eq.f32.partialorder %v89, 0.0
  %v169 = vand.u32 %v89, 2147483648
  %v170 = vsel %vm168, %v169, %v167
  %v171 = vrsqrt.pop %v96
  %v172 = vmul.f32 %v171, %v96
  %v173 = vmul.f32 %v172, %v171
  %v174 = vmul.f32 0.5, %v173
  %v175 = vsub.f32 1.5, %v174
  %v176 = vmul.f32 %v171, %v175
  %v177 = vmul.f32 %v96, %v176
  %vm178 = vcmp.eq.f32.partialorder %v96, inf
  %v179 = vsel %vm178, %v96, %v177
  %vm180 = vcmp.eq.f32.partialorder %v96, 0.0
  %v181 = vand.u32 %v96, 2147483648
  %v182 = vsel %vm180, %v181, %v179
  %v183 = vrsqrt.pop %v103
  %v184 = vmul.f32 %v183, %v103
  %v185 = vmul.f32 %v184, %v183
  %v186 = vmul.f32 0.5, %v185
  %v187 = vsub.f32 1.5, %v186
  %v188 = vmul.f32 %v183, %v187
  %v189 = vmul.f32 %v103, %v188
  %vm190 = vcmp.eq.f32.partialorder %v103, inf
  %v191 = vsel %vm190, %v103, %v189
  %vm192 = vcmp.eq.f32.partialorder %v103, 0.0
  %v193 = vand.u32 %v103, 2147483648
  %v194 = vsel %vm192, %v193, %v191
  %v195 = vrsqrt.pop %v110
  %v196 = vmul.f32 %v195, %v110
  %v197 = vmul.f32 %v196, %v195
  %v198 = vmul.f32 0.5, %v197
  %v199 = vsub.f32 1.5, %v198
  %v200 = vmul.f32 %v195, %v199
  %v201 = vmul.f32 %v110, %v200
  %vm202 = vcmp.eq.f32.partialorder %v110, inf
  %v203 = vsel %vm202, %v110, %v201
  %vm204 = vcmp.eq.f32.partialorder %v110, 0.0
  %v205 = vand.u32 %v110, 2147483648
  %v206 = vsel %vm204, %v205, %v203
  %v207 = vmax.f32 %v122, 1e-12
  %v208 = vmax.f32 %v134, 1e-12
  %v209 = vmax.f32 %v146, 1e-12
  %v210 = vmax.f32 %v158, 1e-12
  %v211 = vmax.f32 %v170, 1e-12
  %v212 = vmax.f32 %v182, 1e-12
  %v213 = vmax.f32 %v194, 1e-12
  %v214 = vmax.f32 %v206, 1e-12
  %v215 = vrcp.pop %v207
  %v216 = vmul.f32 %v207, %v215
  %v217 = vsub.f32 1.0, %v216
  %v218 = vmul.f32 %v215, %v217
  %v219 = vadd.f32 %v215, %v218
  %vm220 = vweird.f32 %v207
  %vm221 = vweird.f32 %v215
  %vm222 = vmor %vm220, %vm221
  %v223 = vsel %vm222, %v215, %v219
  %v224 = vand.u32 2147483647, %v207
  %vm225 = vcmp.eq.f32.partialorder %v224, 8.507059e+37
  %v226 = vand.u32 %v207, 2147483648
  %v227 = vor.u32 1.1754944e-38, %v226
  %v228 = vsel %vm225, %v227, %v223
  %v229 = vmul.f32 %v30, %v228
  %v230 = vrcp.pop %v208
  %v231 = vmul.f32 %v208, %v230
  %v232 = vsub.f32 1.0, %v231
  %v233 = vmul.f32 %v230, %v232
  %v234 = vadd.f32 %v230, %v233
  %vm235 = vweird.f32 %v208
  %vm236 = vweird.f32 %v230
  %vm237 = vmor %vm235, %vm236
  %v238 = vsel %vm237, %v230, %v234
  %v239 = vand.u32 2147483647, %v208
  %vm240 = vcmp.eq.f32.partialorder %v239, 8.507059e+37
  %v241 = vand.u32 %v208, 2147483648
  %v242 = vor.u32 1.1754944e-38, %v241
  %v243 = vsel %vm240, %v242, %v238
  %v244 = vmul.f32 %v31, %v243
  %v245 = vrcp.pop %v209
  %v246 = vmul.f32 %v209, %v245
  %v247 = vsub.f32 1.0, %v246
  %v248 = vmul.f32 %v245, %v247
  %v249 = vadd.f32 %v245, %v248
  %vm250 = vweird.f32 %v209
  %vm251 = vweird.f32 %v245
  %vm252 = vmor %vm250, %vm251
  %v253 = vsel %vm252, %v245, %v249
  %v254 = vand.u32 2147483647, %v209
  %vm255 = vcmp.eq.f32.partialorder %v254, 8.507059e+37
  %v256 = vand.u32 %v209, 2147483648
  %v257 = vor.u32 1.1754944e-38, %v256
  %v258 = vsel %vm255, %v257, %v253
  %v259 = vmul.f32 %v32, %v258
  %v260 = vrcp.pop %v210
  %v261 = vmul.f32 %v210, %v260
  %v262 = vsub.f32 1.0, %v261
  %v263 = vmul.f32 %v260, %v262
  %v264 = vadd.f32 %v260, %v263
  %vm265 = vweird.f32 %v210
  %vm266 = vweird.f32 %v260
  %vm267 = vmor %vm265, %vm266
  %v268 = vsel %vm267, %v260, %v264
  %v269 = vand.u32 2147483647, %v210
  %vm270 = vcmp.eq.f32.partialorder %v269, 8.507059e+37
  %v271 = vand.u32 %v210, 2147483648
  %v272 = vor.u32 1.1754944e-38, %v271
  %v273 = vsel %vm270, %v272, %v268
  %v274 = vmul.f32 %v33, %v273
  %v275 = vrcp.pop %v211
  %v276 = vmul.f32 %v211, %v275
  %v277 = vsub.f32 1.0, %v276
  %v278 = vmul.f32 %v275, %v277
  %v279 = vadd.f32 %v275, %v278
  %vm280 = vweird.f32 %v211
  %vm281 = vweird.f32 %v275
  %vm282 = vmor %vm280, %vm281
  %v283 = vsel %vm282, %v275, %v279
  %v284 = vand.u32 2147483647, %v211
  %vm285 = vcmp.eq.f32.partialorder %v284, 8.507059e+37
  %v286 = vand.u32 %v211, 2147483648
  %v287 = vor.u32 1.1754944e-38, %v286
  %v288 = vsel %vm285, %v287, %v283
  %v289 = vmul.f32 %v34, %v288
  %v290 = vrcp.pop %v212
  %v291 = vmul.f32 %v212, %v290
  %v292 = vsub.f32 1.0, %v291
  %v293 = vmul.f32 %v290, %v292
  %v294 = vadd.f32 %v290, %v293
  %vm295 = vweird.f32 %v212
  %vm296 = vweird.f32 %v290
  %vm297 = vmor %vm295, %vm296
  %v298 = vsel %vm297, %v290, %v294
  %v299 = vand.u32 2147483647, %v212
  %vm300 = vcmp.eq.f32.partialorder %v299, 8.507059e+37
  %v301 = vand.u32 %v212, 2147483648
  %v302 = vor.u32 1.1754944e-38, %v301
  %v303 = vsel %vm300, %v302, %v298
  %v304 = vmul.f32 %v35, %v303
  %v305 = vrcp.pop %v213
  %v306 = vmul.f32 %v213, %v305
  %v307 = vsub.f32 1.0, %v306
  %v308 = vmul.f32 %v305, %v307
  %v309 = vadd.f32 %v305, %v308
  %vm310 = vweird.f32 %v213
  %vm311 = vweird.f32 %v305
  %vm312 = vmor %vm310, %vm311
  %v313 = vsel %vm312, %v305, %v309
  %v314 = vand.u32 2147483647, %v213
  %vm315 = vcmp.eq.f32.partialorder %v314, 8.507059e+37
  %v316 = vand.u32 %v213, 2147483648
  %v317 = vor.u32 1.1754944e-38, %v316
  %v318 = vsel %vm315, %v317, %v313
  %v319 = vmul.f32 %v36, %v318
  %v320 = vrcp.pop %v214
  %v321 = vmul.f32 %v214, %v320
  %v322 = vsub.f32 1.0, %v321
  %v323 = vmul.f32 %v320, %v322
  %v324 = vadd.f32 %v320, %v323
  %vm325 = vweird.f32 %v214
  %vm326 = vweird.f32 %v320
  %vm327 = vmor %vm325, %vm326
  %v328 = vsel %vm327, %v320, %v324
  %v329 = vand.u32 2147483647, %v214
  %vm330 = vcmp.eq.f32.partialorder %v329, 8.507059e+37
  %v331 = vand.u32 %v214, 2147483648
  %v332 = vor.u32 1.1754944e-38, %v331
  %v333 = vsel %vm330, %v332, %v328
  %v334 = vmul.f32 %v37, %v333
  %335 = vst.msk [vmem:[#allocation3] sm:$0xff] %vm54, %v229
  %336 = vst.msk [vmem:[#allocation3 + $0x8] sm:$0xff] %vm54, %v244
  %337 = vst.msk [vmem:[#allocation3 + $0x10] sm:$0xff] %vm54, %v259
  %338 = vst.msk [vmem:[#allocation3 + $0x18] sm:$0xff] %vm54, %v274
  %339 = vst.msk [vmem:[#allocation3 + $0x20] sm:$0xff] %vm54, %v289
  %340 = vst.msk [vmem:[#allocation3 + $0x28] sm:$0xff] %vm54, %v304
  %341 = vst.msk [vmem:[#allocation3 + $0x30] sm:$0xff] %vm54, %v319
  %342 = vst.msk [vmem:[#allocation3 + $0x38] sm:$0xff] %vm54, %v334
  %v343 = vmul.f32 %v38, %v38
  %v344 = vmul.f32 %v39, %v39
  %v345 = vmul.f32 %v40, %v40
  %v346 = vmul.f32 %v41, %v41
  %v347 = vmul.f32 %v42, %v42
  %v348 = vmul.f32 %v43, %v43
  %v349 = vmul.f32 %v44, %v44
  %v350 = vmul.f32 %v45, %v45
  %v351 = vsel %vm54, %v343, 0.0
  %v352 = vrot.slane %v351, 4
  %v353 = vadd.f32 %v351, %v352
  %v354 = vrot.slane %v353, 2
  %v355 = vadd.f32 %v353, %v354
  %v356 = vrot.slane %v355, 1
  %v357 = vadd.f32 %v355, %v356
  %v358 = vsel %vm54, %v344, 0.0
  %v359 = vrot.slane %v358, 4
  %v360 = vadd.f32 %v358, %v359
  %v361 = vrot.slane %v360, 2
  %v362 = vadd.f32 %v360, %v361
  %v363 = vrot.slane %v362, 1
  %v364 = vadd.f32 %v362, %v363
  %v365 = vsel %vm54, %v345, 0.0
  %v366 = vrot.slane %v365, 4
  %v367 = vadd.f32 %v365, %v366
  %v368 = vrot.slane %v367, 2
  %v369 = vadd.f32 %v367, %v368
  %v370 = vrot.slane %v369, 1
  %v371 = vadd.f32 %v369, %v370
  %v372 = vsel %vm54, %v346, 0.0
  %v373 = vrot.slane %v372, 4
  %v374 = vadd.f32 %v372, %v373
  %v375 = vrot.slane %v374, 2
  %v376 = vadd.f32 %v374, %v375
  %v377 = vrot.slane %v376, 1
  %v378 = vadd.f32 %v376, %v377
  %v379 = vsel %vm54, %v347, 0.0
  %v380 = vrot.slane %v379, 4
  %v381 = vadd.f32 %v379, %v380
  %v382 = vrot.slane %v381, 2
  %v383 = vadd.f32 %v381, %v382
  %v384 = vrot.slane %v383, 1
  %v385 = vadd.f32 %v383, %v384
  %v386 = vsel %vm54, %v348, 0.0
  %v387 = vrot.slane %v386, 4
  %v388 = vadd.f32 %v386, %v387
  %v389 = vrot.slane %v388, 2
  %v390 = vadd.f32 %v388, %v389
  %v391 = vrot.slane %v390, 1
  %v392 = vadd.f32 %v390, %v391
  %v393 = vsel %vm54, %v349, 0.0
  %v394 = vrot.slane %v393, 4
  %v395 = vadd.f32 %v393, %v394
  %v396 = vrot.slane %v395, 2
  %v397 = vadd.f32 %v395, %v396
  %v398 = vrot.slane %v397, 1
  %v399 = vadd.f32 %v397, %v398
  %v400 = vsel %vm54, %v350, 0.0
  %v401 = vrot.slane %v400, 4
  %v402 = vadd.f32 %v400, %v401
  %v403 = vrot.slane %v402, 2
  %v404 = vadd.f32 %v402, %v403
  %v405 = vrot.slane %v404, 1
  %v406 = vadd.f32 %v404, %v405
  %v407 = vrsqrt.pop %v357
  %v408 = vmul.f32 %v407, %v357
  %v409 = vmul.f32 %v408, %v407
  %v410 = vmul.f32 0.5, %v409
  %v411 = vsub.f32 1.5, %v410
  %v412 = vmul.f32 %v407, %v411
  %v413 = vmul.f32 %v357, %v412
  %vm414 = vcmp.eq.f32.partialorder %v357, inf
  %v415 = vsel %vm414, %v357, %v413
  %vm416 = vcmp.eq.f32.partialorder %v357, 0.0
  %v417 = vand.u32 %v357, 2147483648
  %v418 = vsel %vm416, %v417, %v415
  %v419 = vrsqrt.pop %v364
  %v420 = vmul.f32 %v419, %v364
  %v421 = vmul.f32 %v420, %v419
  %v422 = vmul.f32 0.5, %v421
  %v423 = vsub.f32 1.5, %v422
  %v424 = vmul.f32 %v419, %v423
  %v425 = vmul.f32 %v364, %v424
  %vm426 = vcmp.eq.f32.partialorder %v364, inf
  %v427 = vsel %vm426, %v364, %v425
  %vm428 = vcmp.eq.f32.partialorder %v364, 0.0
  %v429 = vand.u32 %v364, 2147483648
  %v430 = vsel %vm428, %v429, %v427
  %v431 = vrsqrt.pop %v371
  %v432 = vmul.f32 %v431, %v371
  %v433 = vmul.f32 %v432, %v431
  %v434 = vmul.f32 0.5, %v433
  %v435 = vsub.f32 1.5, %v434
  %v436 = vmul.f32 %v431, %v435
  %v437 = vmul.f32 %v371, %v436
  %vm438 = vcmp.eq.f32.partialorder %v371, inf
  %v439 = vsel %vm438, %v371, %v437
  %vm440 = vcmp.eq.f32.partialorder %v371, 0.0
  %v441 = vand.u32 %v371, 2147483648
  %v442 = vsel %vm440, %v441, %v439
  %v443 = vrsqrt.pop %v378
  %v444 = vmul.f32 %v443, %v378
  %v445 = vmul.f32 %v444, %v443
  %v446 = vmul.f32 0.5, %v445
  %v447 = vsub.f32 1.5, %v446
  %v448 = vmul.f32 %v443, %v447
  %v449 = vmul.f32 %v378, %v448
  %vm450 = vcmp.eq.f32.partialorder %v378, inf
  %v451 = vsel %vm450, %v378, %v449
  %vm452 = vcmp.eq.f32.partialorder %v378, 0.0
  %v453 = vand.u32 %v378, 2147483648
  %v454 = vsel %vm452, %v453, %v451
  %v455 = vrsqrt.pop %v385
  %v456 = vmul.f32 %v455, %v385
  %v457 = vmul.f32 %v456, %v455
  %v458 = vmul.f32 0.5, %v457
  %v459 = vsub.f32 1.5, %v458
  %v460 = vmul.f32 %v455, %v459
  %v461 = vmul.f32 %v385, %v460
  %vm462 = vcmp.eq.f32.partialorder %v385, inf
  %v463 = vsel %vm462, %v385, %v461
  %vm464 = vcmp.eq.f32.partialorder %v385, 0.0
  %v465 = vand.u32 %v385, 2147483648
  %v466 = vsel %vm464, %v465, %v463
  %v467 = vrsqrt.pop %v392
  %v468 = vmul.f32 %v467, %v392
  %v469 = vmul.f32 %v468, %v467
  %v470 = vmul.f32 0.5, %v469
  %v471 = vsub.f32 1.5, %v470
  %v472 = vmul.f32 %v467, %v471
  %v473 = vmul.f32 %v392, %v472
  %vm474 = vcmp.eq.f32.partialorder %v392, inf
  %v475 = vsel %vm474, %v392, %v473
  %vm476 = vcmp.eq.f32.partialorder %v392, 0.0
  %v477 = vand.u32 %v392, 2147483648
  %v478 = vsel %vm476, %v477, %v475
  %v479 = vrsqrt.pop %v399
  %v480 = vmul.f32 %v479, %v399
  %v481 = vmul.f32 %v480, %v479
  %v482 = vmul.f32 0.5, %v481
  %v483 = vsub.f32 1.5, %v482
  %v484 = vmul.f32 %v479, %v483
  %v485 = vmul.f32 %v399, %v484
  %vm486 = vcmp.eq.f32.partialorder %v399, inf
  %v487 = vsel %vm486, %v399, %v485
  %vm488 = vcmp.eq.f32.partialorder %v399, 0.0
  %v489 = vand.u32 %v399, 2147483648
  %v490 = vsel %vm488, %v489, %v487
  %v491 = vrsqrt.pop %v406
  %v492 = vmul.f32 %v491, %v406
  %v493 = vmul.f32 %v492, %v491
  %v494 = vmul.f32 0.5, %v493
  %v495 = vsub.f32 1.5, %v494
  %v496 = vmul.f32 %v491, %v495
  %v497 = vmul.f32 %v406, %v496
  %vm498 = vcmp.eq.f32.partialorder %v406, inf
  %v499 = vsel %vm498, %v406, %v497
  %vm500 = vcmp.eq.f32.partialorder %v406, 0.0
  %v501 = vand.u32 %v406, 2147483648
  %v502 = vsel %vm500, %v501, %v499
  %v503 = vmax.f32 %v418, 1e-12
  %v504 = vmax.f32 %v430, 1e-12
  %v505 = vmax.f32 %v442, 1e-12
  %v506 = vmax.f32 %v454, 1e-12
  %v507 = vmax.f32 %v466, 1e-12
  %v508 = vmax.f32 %v478, 1e-12
  %v509 = vmax.f32 %v490, 1e-12
  %v510 = vmax.f32 %v502, 1e-12
  %v511 = vrcp.pop %v503
  %v512 = vmul.f32 %v503, %v511
  %v513 = vsub.f32 1.0, %v512
  %v514 = vmul.f32 %v511, %v513
  %v515 = vadd.f32 %v511, %v514
  %vm516 = vweird.f32 %v503
  %vm517 = vweird.f32 %v511
  %vm518 = vmor %vm516, %vm517
  %v519 = vsel %vm518, %v511, %v515
  %v520 = vand.u32 2147483647, %v503
  %vm521 = vcmp.eq.f32.partialorder %v520, 8.507059e+37
  %v522 = vand.u32 %v503, 2147483648
  %v523 = vor.u32 1.1754944e-38, %v522
  %v524 = vsel %vm521, %v523, %v519
  %v525 = vmul.f32 %v38, %v524
  %v526 = vrcp.pop %v504
  %v527 = vmul.f32 %v504, %v526
  %v528 = vsub.f32 1.0, %v527
  %v529 = vmul.f32 %v526, %v528
  %v530 = vadd.f32 %v526, %v529
  %vm531 = vweird.f32 %v504
  %vm532 = vweird.f32 %v526
  %vm533 = vmor %vm531, %vm532
  %v534 = vsel %vm533, %v526, %v530
  %v535 = vand.u32 2147483647, %v504
  %vm536 = vcmp.eq.f32.partialorder %v535, 8.507059e+37
  %v537 = vand.u32 %v504, 2147483648
  %v538 = vor.u32 1.1754944e-38, %v537
  %v539 = vsel %vm536, %v538, %v534
  %v540 = vmul.f32 %v39, %v539
  %v541 = vrcp.pop %v505
  %v542 = vmul.f32 %v505, %v541
  %v543 = vsub.f32 1.0, %v542
  %v544 = vmul.f32 %v541, %v543
  %v545 = vadd.f32 %v541, %v544
  %vm546 = vweird.f32 %v505
  %vm547 = vweird.f32 %v541
  %vm548 = vmor %vm546, %vm547
  %v549 = vsel %vm548, %v541, %v545
  %v550 = vand.u32 2147483647, %v505
  %vm551 = vcmp.eq.f32.partialorder %v550, 8.507059e+37
  %v552 = vand.u32 %v505, 2147483648
  %v553 = vor.u32 1.1754944e-38, %v552
  %v554 = vsel %vm551, %v553, %v549
  %v555 = vmul.f32 %v40, %v554
  %v556 = vrcp.pop %v506
  %v557 = vmul.f32 %v506, %v556
  %v558 = vsub.f32 1.0, %v557
  %v559 = vmul.f32 %v556, %v558
  %v560 = vadd.f32 %v556, %v559
  %vm561 = vweird.f32 %v506
  %vm562 = vweird.f32 %v556
  %vm563 = vmor %vm561, %vm562
  %v564 = vsel %vm563, %v556, %v560
  %v565 = vand.u32 2147483647, %v506
  %vm566 = vcmp.eq.f32.partialorder %v565, 8.507059e+37
  %v567 = vand.u32 %v506, 2147483648
  %v568 = vor.u32 1.1754944e-38, %v567
  %v569 = vsel %vm566, %v568, %v564
  %v570 = vmul.f32 %v41, %v569
  %v571 = vrcp.pop %v507
  %v572 = vmul.f32 %v507, %v571
  %v573 = vsub.f32 1.0, %v572
  %v574 = vmul.f32 %v571, %v573
  %v575 = vadd.f32 %v571, %v574
  %vm576 = vweird.f32 %v507
  %vm577 = vweird.f32 %v571
  %vm578 = vmor %vm576, %vm577
  %v579 = vsel %vm578, %v571, %v575
  %v580 = vand.u32 2147483647, %v507
  %vm581 = vcmp.eq.f32.partialorder %v580, 8.507059e+37
  %v582 = vand.u32 %v507, 2147483648
  %v583 = vor.u32 1.1754944e-38, %v582
  %v584 = vsel %vm581, %v583, %v579
  %v585 = vmul.f32 %v42, %v584
  %v586 = vrcp.pop %v508
  %v587 = vmul.f32 %v508, %v586
  %v588 = vsub.f32 1.0, %v587
  %v589 = vmul.f32 %v586, %v588
  %v590 = vadd.f32 %v586, %v589
  %vm591 = vweird.f32 %v508
  %vm592 = vweird.f32 %v586
  %vm593 = vmor %vm591, %vm592
  %v594 = vsel %vm593, %v586, %v590
  %v595 = vand.u32 2147483647, %v508
  %vm596 = vcmp.eq.f32.partialorder %v595, 8.507059e+37
  %v597 = vand.u32 %v508, 2147483648
  %v598 = vor.u32 1.1754944e-38, %v597
  %v599 = vsel %vm596, %v598, %v594
  %v600 = vmul.f32 %v43, %v599
  %v601 = vrcp.pop %v509
  %v602 = vmul.f32 %v509, %v601
  %v603 = vsub.f32 1.0, %v602
  %v604 = vmul.f32 %v601, %v603
  %v605 = vadd.f32 %v601, %v604
  %vm606 = vweird.f32 %v509
  %vm607 = vweird.f32 %v601
  %vm608 = vmor %vm606, %vm607
  %v609 = vsel %vm608, %v601, %v605
  %v610 = vand.u32 2147483647, %v509
  %vm611 = vcmp.eq.f32.partialorder %v610, 8.507059e+37
  %v612 = vand.u32 %v509, 2147483648
  %v613 = vor.u32 1.1754944e-38, %v612
  %v614 = vsel %vm611, %v613, %v609
  %v615 = vmul.f32 %v44, %v614
  %v616 = vrcp.pop %v510
  %v617 = vmul.f32 %v510, %v616
  %v618 = vsub.f32 1.0, %v617
  %v619 = vmul.f32 %v616, %v618
  %v620 = vadd.f32 %v616, %v619
  %vm621 = vweird.f32 %v510
  %vm622 = vweird.f32 %v616
  %vm623 = vmor %vm621, %vm622
  %v624 = vsel %vm623, %v616, %v620
  %v625 = vand.u32 2147483647, %v510
  %vm626 = vcmp.eq.f32.partialorder %v625, 8.507059e+37
  %v627 = vand.u32 %v510, 2147483648
  %v628 = vor.u32 1.1754944e-38, %v627
  %v629 = vsel %vm626, %v628, %v624
  %v630 = vmul.f32 %v45, %v629
  %631 = vst.msk [vmem:[#allocation4] sm:$0xff] %vm54, %v525
  %632 = vst.msk [vmem:[#allocation4 + $0x8] sm:$0xff] %vm54, %v540
  %633 = vst.msk [vmem:[#allocation4 + $0x10] sm:$0xff] %vm54, %v555
  %634 = vst.msk [vmem:[#allocation4 + $0x18] sm:$0xff] %vm54, %v570
  %635 = vst.msk [vmem:[#allocation4 + $0x20] sm:$0xff] %vm54, %v585
  %636 = vst.msk [vmem:[#allocation4 + $0x28] sm:$0xff] %vm54, %v600
  %637 = vst.msk [vmem:[#allocation4 + $0x30] sm:$0xff] %vm54, %v615
  %638 = vst.msk [vmem:[#allocation4 + $0x38] sm:$0xff] %vm54, %v630
  %v639 = vld [vmem:[%s3] sm:$0xff]
  %v640 = vld [vmem:[%s3 + $0x8] sm:$0xff]
  %v641 = vld [vmem:[%s3 + $0x10] sm:$0xff]
  %v642 = vld [vmem:[%s3 + $0x18] sm:$0xff]
  %v643 = vld [vmem:[%s3 + $0x20] sm:$0xff]
  %v644 = vld [vmem:[%s3 + $0x28] sm:$0xff]
  %v645 = vld [vmem:[%s3 + $0x30] sm:$0xff]
  %v646 = vld [vmem:[%s3 + $0x38] sm:$0xff]
  %v647 = vxor.u32 %v639, 2147483648
  %v648 = vxor.u32 %v640, 2147483648
  %v649 = vxor.u32 %v641, 2147483648
  %v650 = vxor.u32 %v642, 2147483648
  %v651 = vxor.u32 %v643, 2147483648
  %v652 = vxor.u32 %v644, 2147483648
  %v653 = vxor.u32 %v645, 2147483648
  %v654 = vxor.u32 %v646, 2147483648
  %v655 = vmul.f32 %v647, 1.442695
  %v656 = vpow.pop %v655
  %v657 = vmul.f32 %v648, 1.442695
  %v658 = vpow.pop %v657
  %v659 = vmul.f32 %v649, 1.442695
  %v660 = vpow.pop %v659
  %v661 = vmul.f32 %v650, 1.442695
  %v662 = vpow.pop %v661
  %v663 = vmul.f32 %v651, 1.442695
  %v664 = vpow.pop %v663
  %v665 = vmul.f32 %v652, 1.442695
  %v666 = vpow.pop %v665
  %v667 = vmul.f32 %v653, 1.442695
  %v668 = vpow.pop %v667
  %v669 = vmul.f32 %v654, 1.442695
  %v670 = vpow.pop %v669
  %v671 = vadd.f32 %v656, 1.0
  %v672 = vadd.f32 %v658, 1.0
  %v673 = vadd.f32 %v660, 1.0
  %v674 = vadd.f32 %v662, 1.0
  %v675 = vadd.f32 %v664, 1.0
  %v676 = vadd.f32 %v666, 1.0
  %v677 = vadd.f32 %v668, 1.0
  %v678 = vadd.f32 %v670, 1.0
  %v679 = vrcp.pop %v671
  %v680 = vmul.f32 %v671, %v679
  %v681 = vsub.f32 1.0, %v680
  %v682 = vmul.f32 %v679, %v681
  %v683 = vadd.f32 %v679, %v682
  %vm684 = vweird.f32 %v671
  %vm685 = vweird.f32 %v679
  %vm686 = vmor %vm684, %vm685
  %v687 = vsel %vm686, %v679, %v683
  %v688 = vand.u32 2147483647, %v671
  %vm689 = vcmp.eq.f32.partialorder %v688, 8.507059e+37
  %v690 = vand.u32 %v671, 2147483648
  %v691 = vor.u32 1.1754944e-38, %v690
  %v692 = vsel %vm689, %v691, %v687
  %v693 = vmul.f32 1.0, %v692
  %v694 = vrcp.pop %v672
  %v695 = vmul.f32 %v672, %v694
  %v696 = vsub.f32 1.0, %v695
  %v697 = vmul.f32 %v694, %v696
  %v698 = vadd.f32 %v694, %v697
  %vm699 = vweird.f32 %v672
  %vm700 = vweird.f32 %v694
  %vm701 = vmor %vm699, %vm700
  %v702 = vsel %vm701, %v694, %v698
  %v703 = vand.u32 2147483647, %v672
  %vm704 = vcmp.eq.f32.partialorder %v703, 8.507059e+37
  %v705 = vand.u32 %v672, 2147483648
  %v706 = vor.u32 1.1754944e-38, %v705
  %v707 = vsel %vm704, %v706, %v702
  %v708 = vmul.f32 1.0, %v707
  %v709 = vrcp.pop %v673
  %v710 = vmul.f32 %v673, %v709
  %v711 = vsub.f32 1.0, %v710
  %v712 = vmul.f32 %v709, %v711
  %v713 = vadd.f32 %v709, %v712
  %vm714 = vweird.f32 %v673
  %vm715 = vweird.f32 %v709
  %vm716 = vmor %vm714, %vm715
  %v717 = vsel %vm716, %v709, %v713
  %v718 = vand.u32 2147483647, %v673
  %vm719 = vcmp.eq.f32.partialorder %v718, 8.507059e+37
  %v720 = vand.u32 %v673, 2147483648
  %v721 = vor.u32 1.1754944e-38, %v720
  %v722 = vsel %vm719, %v721, %v717
  %v723 = vmul.f32 1.0, %v722
  %v724 = vrcp.pop %v674
  %v725 = vmul.f32 %v674, %v724
  %v726 = vsub.f32 1.0, %v725
  %v727 = vmul.f32 %v724, %v726
  %v728 = vadd.f32 %v724, %v727
  %vm729 = vweird.f32 %v674
  %vm730 = vweird.f32 %v724
  %vm731 = vmor %vm729, %vm730
  %v732 = vsel %vm731, %v724, %v728
  %v733 = vand.u32 2147483647, %v674
  %vm734 = vcmp.eq.f32.partialorder %v733, 8.507059e+37
  %v735 = vand.u32 %v674, 2147483648
  %v736 = vor.u32 1.1754944e-38, %v735
  %v737 = vsel %vm734, %v736, %v732
  %v738 = vmul.f32 1.0, %v737
  %v739 = vrcp.pop %v675
  %v740 = vmul.f32 %v675, %v739
  %v741 = vsub.f32 1.0, %v740
  %v742 = vmul.f32 %v739, %v741
  %v743 = vadd.f32 %v739, %v742
  %vm744 = vweird.f32 %v675
  %vm745 = vweird.f32 %v739
  %vm746 = vmor %vm744, %vm745
  %v747 = vsel %vm746, %v739, %v743
  %v748 = vand.u32 2147483647, %v675
  %vm749 = vcmp.eq.f32.partialorder %v748, 8.507059e+37
  %v750 = vand.u32 %v675, 2147483648
  %v751 = vor.u32 1.1754944e-38, %v750
  %v752 = vsel %vm749, %v751, %v747
  %v753 = vmul.f32 1.0, %v752
  %v754 = vrcp.pop %v676
  %v755 = vmul.f32 %v676, %v754
  %v756 = vsub.f32 1.0, %v755
  %v757 = vmul.f32 %v754, %v756
  %v758 = vadd.f32 %v754, %v757
  %vm759 = vweird.f32 %v676
  %vm760 = vweird.f32 %v754
  %vm761 = vmor %vm759, %vm760
  %v762 = vsel %vm761, %v754, %v758
  %v763 = vand.u32 2147483647, %v676
  %vm764 = vcmp.eq.f32.partialorder %v763, 8.507059e+37
  %v765 = vand.u32 %v676, 2147483648
  %v766 = vor.u32 1.1754944e-38, %v765
  %v767 = vsel %vm764, %v766, %v762
  %v768 = vmul.f32 1.0, %v767
  %v769 = vrcp.pop %v677
  %v770 = vmul.f32 %v677, %v769
  %v771 = vsub.f32 1.0, %v770
  %v772 = vmul.f32 %v769, %v771
  %v773 = vadd.f32 %v769, %v772
  %vm774 = vweird.f32 %v677
  %vm775 = vweird.f32 %v769
  %vm776 = vmor %vm774, %vm775
  %v777 = vsel %vm776, %v769, %v773
  %v778 = vand.u32 2147483647, %v677
  %vm779 = vcmp.eq.f32.partialorder %v778, 8.507059e+37
  %v780 = vand.u32 %v677, 2147483648
  %v781 = vor.u32 1.1754944e-38, %v780
  %v782 = vsel %vm779, %v781, %v777
  %v783 = vmul.f32 1.0, %v782
  %v784 = vrcp.pop %v678
  %v785 = vmul.f32 %v678, %v784
  %v786 = vsub.f32 1.0, %v785
  %v787 = vmul.f32 %v784, %v786
  %v788 = vadd.f32 %v784, %v787
  %vm789 = vweird.f32 %v678
  %vm790 = vweird.f32 %v784
  %vm791 = vmor %vm789, %vm790
  %v792 = vsel %vm791, %v784, %v788
  %v793 = vand.u32 2147483647, %v678
  %vm794 = vcmp.eq.f32.partialorder %v793, 8.507059e+37
  %v795 = vand.u32 %v678, 2147483648
  %v796 = vor.u32 1.1754944e-38, %v795
  %v797 = vsel %vm794, %v796, %v792
  %v798 = vmul.f32 1.0, %v797
  %799 = vst.msk [vmem:[#allocation5] sm:$0xff] %vm54, %v693
  %800 = vst.msk [vmem:[#allocation5 + $0x8] sm:$0xff] %vm54, %v708
  %801 = vst.msk [vmem:[#allocation5 + $0x10] sm:$0xff] %vm54, %v723
  %802 = vst.msk [vmem:[#allocation5 + $0x18] sm:$0xff] %vm54, %v738
  %803 = vst.msk [vmem:[#allocation5 + $0x20] sm:$0xff] %vm54, %v753
  %804 = vst.msk [vmem:[#allocation5 + $0x28] sm:$0xff] %vm54, %v768
  %805 = vst.msk [vmem:[#allocation5 + $0x30] sm:$0xff] %vm54, %v783
  %806 = vst.msk [vmem:[#allocation5 + $0x38] sm:$0xff] %vm54, %v798
  %v807 = vld [vmem:[#allocation2] sm:$0xff]
  %v808 = vld [vmem:[#allocation2 + $0x8] sm:$0xff]
  %v809 = vld [vmem:[#allocation2 + $0x10] sm:$0xff]
  %v810 = vld [vmem:[#allocation2 + $0x18] sm:$0xff]
  %v811 = vld [vmem:[#allocation2 + $0x20] sm:$0xff]
  %v812 = vld [vmem:[#allocation2 + $0x28] sm:$0xff]
  %v813 = vld [vmem:[#allocation2 + $0x30] sm:$0xff]
  %v814 = vld [vmem:[#allocation2 + $0x38] sm:$0xff]
  loop: start=0, step=1, limit=8
  $region22: #{working_memory_forward.4} parent=0 // loop_pre_header
    _
  $region23: #{working_memory_forward.4} parent=0 // loop_header
    %s816 = sphi 0, %s820
    %p817 = scmp.ge.s32.totalorder %s816, 8
    %v821 = vphi %v807, %v944
    %v822 = vphi %v808, %v945
    %v823 = vphi %v809, %v946
    %v824 = vphi %v810, %v947
    %v825 = vphi %v811, %v948
    %v826 = vphi %v812, %v949
    %v827 = vphi %v813, %v950
    %v828 = vphi %v814, %v951
  $region24: #{working_memory_forward.4} parent=0 // loop_header_branch
    %819 = sbr.rel (%p817) target = $region28
  $region25: #{working_memory_forward.4} parent=0 // loop_body
    %s829 = smul.u32 %s816, 8
    %s830 = scalar_lea.vmem %s0, %s829
    %v831 = vld [vmem:[%s830] sm:$0xff]
    %s832 = scalar_lea.vmem [#allocation3], %s829
    %v833 = vld [vmem:[%s832] sm:$0xff]
    %s834 = scalar_lea.vmem [#allocation4], %s829
    %v835 = vld [vmem:[%s834] sm:$0xff]
    %s836 = scalar_lea.vmem [#allocation5], %s829
    %v837 = vld [vmem:[%s836] sm:$0xff]
    %v839 = vrot.slane %v831, 1
    %v840 = vrot.slane %v831, 2
    %v841 = vrot.slane %v831, 3
    %v842 = vrot.slane %v831, 4
    %v843 = vrot.slane %v831, 5
    %v844 = vrot.slane %v831, 6
    %v845 = vrot.slane %v831, 7
    %v846 = vperm.slane %v831, 0
    %v847 = vperm.slane %v839, 0
    %v848 = vperm.slane %v840, 0
    %v849 = vperm.slane %v841, 0
    %v850 = vperm.slane %v842, 0
    %v851 = vperm.slane %v843, 0
    %v852 = vperm.slane %v844, 0
    %v853 = vperm.slane %v845, 0
    %v862 = vmul.f32 %v846, %v821
    %v863 = vmul.f32 %v847, %v822
    %v864 = vmul.f32 %v848, %v823
    %v865 = vmul.f32 %v849, %v824
    %v866 = vmul.f32 %v850, %v825
    %v867 = vmul.f32 %v851, %v826
    %v868 = vmul.f32 %v852, %v827
    %v869 = vmul.f32 %v853, %v828
    %v870 = vsel %vm54, %v862, 0.0
    %v871 = vsel %vm54, %v863, 0.0
    %v872 = vadd.f32 %v870, %v871
    %v873 = vsel %vm54, %v864, 0.0
    %v874 = vadd.f32 %v872, %v873
    %v875 = vsel %vm54, %v865, 0.0
    %v876 = vadd.f32 %v874, %v875
    %v877 = vsel %vm54, %v866, 0.0
    %v878 = vadd.f32 %v876, %v877
    %v879 = vsel %vm54, %v867, 0.0
    %v880 = vadd.f32 %v878, %v879
    %v881 = vsel %vm54, %v868, 0.0
    %v882 = vadd.f32 %v880, %v881
    %v883 = vsel %vm54, %v869, 0.0
    %v884 = vadd.f32 %v882, %v883
    %s885 = scalar_lea.vmem %s4, %s829
    %886 = vst.msk [vmem:[%s885] sm:$0xff] %vm54, %v884
    %v888 = vrot.slane %v833, 1
    %v889 = vrot.slane %v833, 2
    %v890 = vrot.slane %v833, 3
    %v891 = vrot.slane %v833, 4
    %v892 = vrot.slane %v833, 5
    %v893 = vrot.slane %v833, 6
    %v894 = vrot.slane %v833, 7
    %v895 = vperm.slane %v833, 0
    %v896 = vperm.slane %v888, 0
    %v897 = vperm.slane %v889, 0
    %v898 = vperm.slane %v890, 0
    %v899 = vperm.slane %v891, 0
    %v900 = vperm.slane %v892, 0
    %v901 = vperm.slane %v893, 0
    %v902 = vperm.slane %v894, 0
    %v911 = vmul.f32 %v895, %v821
    %v912 = vmul.f32 %v896, %v822
    %v913 = vmul.f32 %v897, %v823
    %v914 = vmul.f32 %v898, %v824
    %v915 = vmul.f32 %v899, %v825
    %v916 = vmul.f32 %v900, %v826
    %v917 = vmul.f32 %v901, %v827
    %v918 = vmul.f32 %v902, %v828
    %v919 = vsel %vm54, %v911, 0.0
    %v920 = vsel %vm54, %v912, 0.0
    %v921 = vadd.f32 %v919, %v920
    %v922 = vsel %vm54, %v913, 0.0
    %v923 = vadd.f32 %v921, %v922
    %v924 = vsel %vm54, %v914, 0.0
    %v925 = vadd.f32 %v923, %v924
    %v926 = vsel %vm54, %v915, 0.0
    %v927 = vadd.f32 %v925, %v926
    %v928 = vsel %vm54, %v916, 0.0
    %v929 = vadd.f32 %v927, %v928
    %v930 = vsel %vm54, %v917, 0.0
    %v931 = vadd.f32 %v929, %v930
    %v932 = vsel %vm54, %v918, 0.0
    %v933 = vadd.f32 %v931, %v932
    %v934 = vsub.f32 %v835, %v933
    %v935 = vmul.f32 %v837, %v934
    %v936 = vmul.f32 %v895, %v935
    %v937 = vmul.f32 %v896, %v935
    %v938 = vmul.f32 %v897, %v935
    %v939 = vmul.f32 %v898, %v935
    %v940 = vmul.f32 %v899, %v935
    %v941 = vmul.f32 %v900, %v935
    %v942 = vmul.f32 %v901, %v935
    %v943 = vmul.f32 %v902, %v935
    %v944 = vadd.f32 %v821, %v936
    %v945 = vadd.f32 %v822, %v937
    %v946 = vadd.f32 %v823, %v938
    %v947 = vadd.f32 %v824, %v939
    %v948 = vadd.f32 %v825, %v940
    %v949 = vadd.f32 %v826, %v941
    %v950 = vadd.f32 %v827, %v942
    %v951 = vadd.f32 %v828, %v943
  $region26: #{working_memory_forward.4} parent=0 // loop_footer
    %s820 = sadd.s32 1, %s816
  $region27: #{working_memory_forward.4} parent=0 // loop_footer_branch
    %815 = sbr.rel target = $region23
  $region28: #{working_memory_forward.4} parent=0 // loop_exit
    _
  %952 = vst.msk [vmem:[#allocation2] sm:$0xff] %vm54, %v821
  %953 = vst.msk [vmem:[#allocation2 + $0x8] sm:$0xff] %vm54, %v822
  %954 = vst.msk [vmem:[#allocation2 + $0x10] sm:$0xff] %vm54, %v823
  %955 = vst.msk [vmem:[#allocation2 + $0x18] sm:$0xff] %vm54, %v824
  %956 = vst.msk [vmem:[#allocation2 + $0x20] sm:$0xff] %vm54, %v825
  %957 = vst.msk [vmem:[#allocation2 + $0x28] sm:$0xff] %vm54, %v826
  %958 = vst.msk [vmem:[#allocation2 + $0x30] sm:$0xff] %vm54, %v827
  %959 = vst.msk [vmem:[#allocation2 + $0x38] sm:$0xff] %vm54, %v828
  // Predicated region
  $region29: #{working_memory_forward.4} parent=0 // pred_check
    _
  $region30: #{working_memory_forward.4} parent=0 // pred_check_branch
    %961 = sbr.rel (0) target = $region32
  $region31: #{working_memory_forward.4} parent=0 // pred_region
    _
  $region32: #{working_memory_forward.4} parent=0 // pred_fallthru
    _
  // Predicated region
  $region33: #{working_memory_forward.4} parent=0 // pred_check
    _
  $region34: #{working_memory_forward.4} parent=0 // pred_check_branch
    %963 = sbr.rel (0) target = $region36
  $region35: #{working_memory_forward.4} parent=0 // pred_region
    _
  $region36: #{working_memory_forward.4} parent=0 // pred_fallthru
    _

</llo_original>
